<compile_context>
chip_gen: v7x
topology: tpu7x:2x2x1
jax: 0.10.0
libtpu: 0.0.40
codegen_flags: <defaults>
</compile_context>

<pallas_src>
import jax
import jax.numpy as jnp
from jax.experimental import pallas as pl
from jax.experimental.pallas import tpu as pltpu

OUT_CH = 400                     # per-scale output width -> logical total 1200
OUT_PAD = 1280                   # padded to a multiple of 128 for lane-dense stores


# ----------------------------------------------------------------------------
# Kernels
# ----------------------------------------------------------------------------
def _resident_kernel(x_ref, l_ref, w_ref, b_ref, out_ref):
    """Gridless path: L_hat (bf16) fully resident in VMEM, read from HBM once."""
    x = x_ref[...]                                        # [n_pad, F]      bf16
    lhat = l_ref[...]                                     # [n_pad, n_pad]  bf16
    tx1 = jnp.dot(lhat, x, preferred_element_type=jnp.float32)            # [n_pad, F]
    tx1_bf = tx1.astype(jnp.bfloat16)
    tx2 = (2.0 * jnp.dot(lhat, tx1_bf, preferred_element_type=jnp.float32)
           - x.astype(jnp.float32))
    acc = jnp.dot(x, w_ref[0], preferred_element_type=jnp.float32)
    acc = acc + jnp.dot(tx1_bf, w_ref[1], preferred_element_type=jnp.float32)
    acc = acc + jnp.dot(tx2.astype(jnp.bfloat16), w_ref[2],
                        preferred_element_type=jnp.float32)
    out_ref[...] = (acc + b_ref[...]).astype(out_ref.dtype)


def _prop_kernel(l_ref, x_ref, tx1_ref):
    """Tiled phase 1: Tx_1[row block] = L_hat[row block, :] @ x, emitted as bf16."""
    tx1_ref[...] = jnp.dot(l_ref[...], x_ref[...],
                           preferred_element_type=jnp.float32).astype(tx1_ref.dtype)


def _tiled_kernel(x_ref, l_ref, tx1_ref, w_ref, b_ref, out_ref):
    """Tiled phase 2: per-row-block Tx_2 + fused weight matmul (+bias)."""
    tm = x_ref.shape[0]
    start = pl.multiple_of(pl.program_id(0) * tm, tm)
    x_blk = x_ref[...]                                    # [tm, F]     bf16
    tx1_full = tx1_ref[...]                               # [n_pad, F]  bf16 (resident)
    tx1_blk = tx1_ref[pl.ds(start, tm), :]                # [tm, F]     bf16
    ltx1 = jnp.dot(l_ref[...], tx1_full, preferred_element_type=jnp.float32)
    tx2 = 2.0 * ltx1 - x_blk.astype(jnp.float32)
    acc = jnp.dot(x_blk, w_ref[0], preferred_element_type=jnp.float32)
    acc = acc + jnp.dot(tx1_blk, w_ref[1], preferred_element_type=jnp.float32)
    acc = acc + jnp.dot(tx2.astype(jnp.bfloat16), w_ref[2],
                        preferred_element_type=jnp.float32)
    out_ref[...] = (acc + b_ref[...]).astype(out_ref.dtype)


# ----------------------------------------------------------------------------
# Plain-JAX glue (normalization / parameter fusion / sizing / dispatch)
# ----------------------------------------------------------------------------
def build_lhat(num_nodes, edge_index, edge_weight, *, n_pad=None, dtype=jnp.float32):
    """Dense L_hat exactly as ChebConv.__norm__ (sym, lambda_max=2):
       L_hat = -D^{-1/2} A D^{-1/2}, stored as L_hat[dst, src].
       Built directly at the padded shape / target dtype (single scatter pass)."""
    # TODO(synk): the data-dependent edge scatter (degree accumulation + dense
    # scatter into L_hat) stays in plain JAX; it has no clean tile-level Pallas form.
    # NOTE: degree is accumulated at edge_index[0] while A is stored [dst, src];
    # this matches PyG ChebConv sym norm for undirected/symmetric edge lists.
    if n_pad is None:
        n_pad = num_nodes
    row, col = edge_index[0], edge_index[1]
    ew = edge_weight.astype(jnp.float32)
    deg = jnp.zeros((num_nodes,), jnp.float32).at[row].add(ew)
    dinv = jnp.where(deg > 0, jax.lax.rsqrt(deg), 0.0)
    w_norm = (dinv[row] * ew * dinv[col]).astype(dtype)
    return jnp.zeros((n_pad, n_pad), dtype).at[col, row].add(-w_norm)


def fuse_params(params, in_channels):
    """Stacked weight [3, F, OUT_PAD] (block upper-triangular per scale, zero-padded
       to 1280 lanes) in bf16, and fused bias [1, OUT_PAD] in f32."""
    f = in_channels
    z = jnp.zeros((f, OUT_CH), jnp.float32)
    zp = jnp.zeros((f, OUT_PAD - 3 * OUT_CH), jnp.float32)
    w1, w2, w3 = params["w1"], params["w2"], params["w3"]
    w_row0 = jnp.concatenate([w1[0], w2[0], w3[0], zp], axis=1)
    w_row1 = jnp.concatenate([z,     w2[1], w3[1], zp], axis=1)
    w_row2 = jnp.concatenate([z,     z,     w3[2], zp], axis=1)
    w_stack = jnp.stack([w_row0, w_row1, w_row2], axis=0).astype(jnp.bfloat16)
    bbig = jnp.concatenate(
        [params["b1"], params["b2"], params["b3"],
         jnp.zeros((OUT_PAD - 3 * OUT_CH,), jnp.float32)])[None, :]
    return w_stack, bbig


def _round_up(n, m):
    return ((n + m - 1) // m) * m


def _vmem_capacity():
    """Physical VMEM per core; conservative 64 MiB (v7x) fallback."""
    try:
        return int(pltpu.get_tpu_info().vmem_capacity_bytes)
    except Exception:
        return 64 * 1024 * 1024


def _resident_max_nodes(vmem_limit):
    """Largest multiple of 128 such that resident bf16 L_hat + f32 output/accumulator
       + small intermediates fit under the scoped-VMEM limit (with margin)."""
    n = 128
    while True:
        nxt = n + 128
        need = 2 * nxt * nxt + 2 * 4 * nxt * OUT_PAD + 64 * nxt + (2 << 20)
        if need > vmem_limit:
            return n
        n = nxt


def _choose_tm(n, vmem_limit):
    """Row-block size for the tiled path.  Dominant per-block VMEM: double-buffered
       bf16 L row block (2*tm*n_pad*2 B) + double-buffered f32 out block; keep it
       under ~half the scoped limit.  Floor 128 keeps blocks (8/16,128) aligned."""
    tm = 1024
    while tm > 128:
        n_pad = _round_up(n, tm)
        if 4 * tm * n_pad + 8 * tm * OUT_PAD <= vmem_limit // 2:
            break
        tm //= 2
    # Heuristic: even row-block count so a 2-TensorCore chip (v7x) splits the
    # "parallel" grid axis evenly.
    if (_round_up(n, tm) // tm) % 2 == 1 and tm >= 256:
        tm //= 2
    return tm


def _forward_resident(x_bf, l_bf, w_bf, bbig, vmem_limit):
    n_pad = l_bf.shape[0]
    vm = pl.BlockSpec(memory_space=pltpu.MemorySpace.VMEM)
    return pl.pallas_call(
        _resident_kernel,
        out_shape=jax.ShapeDtypeStruct((n_pad, OUT_PAD), jnp.float32),
        in_specs=[vm, vm, vm, vm],
        out_specs=vm,
        compiler_params=pltpu.CompilerParams(vmem_limit_bytes=vmem_limit),
    )(x_bf, l_bf, w_bf, bbig)


def _forward_tiled(x_bf, l_bf, w_bf, bbig, tm, vmem_limit):
    n_pad = l_bf.shape[0]
    f = x_bf.shape[1]
    grid = (n_pad // tm,)
    cparams = pltpu.CompilerParams(dimension_semantics=("parallel",),
                                   vmem_limit_bytes=vmem_limit)

    # Phase 1: Tx_1 = L_hat @ x for all rows (bf16 result, row-parallel).
    tx1 = pl.pallas_call(
        _prop_kernel,
        out_shape=jax.ShapeDtypeStruct((n_pad, f), jnp.bfloat16),
        grid_spec=pltpu.PrefetchScalarGridSpec(
            num_scalar_prefetch=0, grid=grid,
            in_specs=[pl.BlockSpec((tm, n_pad), lambda i: (i, 0)),
                      pl.BlockSpec((n_pad, f), lambda i: (0, 0))],
            out_specs=pl.BlockSpec((tm, f), lambda i: (i, 0))),
        compiler_params=cparams,
    )(l_bf, x_bf)

    # Phase 2: per-row-block Tx_2 + fused weight matmul + bias.
    out = pl.pallas_call(
        _tiled_kernel,
        out_shape=jax.ShapeDtypeStruct((n_pad, OUT_PAD), jnp.float32),
        grid_spec=pltpu.PrefetchScalarGridSpec(
            num_scalar_prefetch=0, grid=grid,
            in_specs=[pl.BlockSpec((tm, f), lambda i: (i, 0)),        # Tx_0 block
                      pl.BlockSpec((tm, n_pad), lambda i: (i, 0)),    # L row block
                      pl.BlockSpec((n_pad, f), lambda i: (0, 0)),     # Tx_1 (resident)
                      pl.BlockSpec((3, f, OUT_PAD), lambda i: (0, 0, 0)),
                      pl.BlockSpec((1, OUT_PAD), lambda i: (0, 0))],
            out_specs=pl.BlockSpec((tm, OUT_PAD), lambda i: (i, 0))),
        compiler_params=cparams,
    )(x_bf, l_bf, tx1, w_bf, bbig)
    return out


def multichev_forward(x, edge_index, edge_weight, params, *, row_block=None):
    n, f = x.shape
    cap = _vmem_capacity()
    vmem_limit = int(cap * 0.85)
    w_bf, bbig = fuse_params(params, f)

    if row_block is None and n <= _resident_max_nodes(vmem_limit):
        n_pad = _round_up(n, 128)
        lhat = build_lhat(n, edge_index, edge_weight, n_pad=n_pad, dtype=jnp.bfloat16)
        x_bf = jnp.pad(x, ((0, n_pad - n), (0, 0))).astype(jnp.bfloat16)
        out = _forward_resident(x_bf, lhat, w_bf, bbig, vmem_limit)
    else:
        tm = row_block if row_block is not None else _choose_tm(n, vmem_limit)
        assert tm >= 128 and tm % 128 == 0, tm
        n_pad = _round_up(n, tm)
        lhat = build_lhat(n, edge_index, edge_weight, n_pad=n_pad, dtype=jnp.bfloat16)
        x_bf = jnp.pad(x, ((0, n_pad - n), (0, 0))).astype(jnp.bfloat16)
        out = _forward_tiled(x_bf, lhat, w_bf, bbig, tm, vmem_limit)
    # NOTE: padded rows hold bias-only values; this slice must stay.
    return out[:n, :3 * OUT_CH]


# ----------------------------------------------------------------------------
# References & params
# ----------------------------------------------------------------------------
def multichev_reference(x, edge_index, edge_weight, params):
    """Pure f32 reference matching the PyTorch module semantics."""
    lhat = build_lhat(x.shape[0], edge_index, edge_weight, dtype=jnp.float32)
    tx0 = x.astype(jnp.float32)
    tx1 = lhat @ tx0
    tx2 = 2.0 * (lhat @ tx1) - tx0
    s1 = tx0 @ params["w1"][0] + params["b1"]
    s2 = tx0 @ params["w2"][0] + tx1 @ params["w2"][1] + params["b2"]
    s3 = (tx0 @ params["w3"][0] + tx1 @ params["w3"][1] + tx2 @ params["w3"][2]
          + params["b3"])
    return jnp.concatenate([s1, s2, s3], axis=1)


def multichev_reference_bf16(x, edge_index, edge_weight, params):
    """Mirrors the kernel's bf16-operand / f32-accumulation math in plain jnp."""
    lhat = build_lhat(x.shape[0], edge_index, edge_weight, dtype=jnp.bfloat16)
    w_bf, bbig = fuse_params(params, x.shape[1])
    xb = x.astype(jnp.bfloat16)
    tx1 = jnp.dot(lhat, xb, preferred_element_type=jnp.float32)
    tx1_bf = tx1.astype(jnp.bfloat16)
    tx2 = (2.0 * jnp.dot(lhat, tx1_bf, preferred_element_type=jnp.float32)
           - xb.astype(jnp.float32))
    acc = jnp.dot(xb, w_bf[0], preferred_element_type=jnp.float32)
    acc = acc + jnp.dot(tx1_bf, w_bf[1], preferred_element_type=jnp.float32)
    acc = acc + jnp.dot(tx2.astype(jnp.bfloat16), w_bf[2],
                        preferred_element_type=jnp.float32)
    return (acc + bbig)[:, :3 * OUT_CH]


def init_params(key, in_channels):
    ks = jax.random.split(key, 6)
    scale = 1.0 / jnp.sqrt(jnp.float32(in_channels))
    return {
        "w1": jax.random.normal(ks[0], (1, in_channels, OUT_CH), jnp.float32) * scale,
        "w2": jax.random.normal(ks[1], (2, in_channels, OUT_CH), jnp.float32) * scale,
        "w3": jax.random.normal(ks[2], (3, in_channels, OUT_CH), jnp.float32) * scale,
        "b1": jax.random.normal(ks[3], (OUT_CH,), jnp.float32) * 0.1,
        "b2": jax.random.normal(ks[4], (OUT_CH,), jnp.float32) * 0.1,
        "b3": jax.random.normal(ks[5], (OUT_CH,), jnp.float32) * 0.1,
    }


def _ring_graph(key, n):
    """Undirected weighted ring: edges (i, i+1) and (i+1, i), symmetric weights."""
    src = jnp.arange(n, dtype=jnp.int32)
    dst = (src + 1) % n
    edge_index = jnp.stack([jnp.concatenate([src, dst]),
                            jnp.concatenate([dst, src])], axis=0)
    ew_half = jax.random.uniform(key, (n,), jnp.float32, 0.5, 1.5)
    edge_weight = jnp.concatenate([ew_half, ew_half])
    return edge_index, edge_weight


if __name__ == "__main__":
    key = jax.random.PRNGKey(0)
    k_x1, k_e1, k_x2, k_e2, k_w = jax.random.split(key, 5)

    IN_CH = 8
    params = init_params(k_w, IN_CH)
    fwd = jax.jit(multichev_forward, static_argnames=("row_block",))

    # --- Test 1: tiny graph -> gridless L-resident path ----------------------
    N1 = 16
    x1 = jax.random.normal(k_x1, (N1, IN_CH), jnp.float32)
    ei1, ew1 = _ring_graph(k_e1, N1)
    out1 = jax.block_until_ready(fwd(x1, ei1, ew1, params))
    assert out1.shape == (N1, 3 * OUT_CH), out1.shape
    ref1_bf = multichev_reference_bf16(x1, ei1, ew1, params)
    ref1_f32 = multichev_reference(x1, ei1, ew1, params)
    assert jnp.allclose(out1, ref1_bf, atol=2e-2, rtol=2e-2), \
        float(jnp.max(jnp.abs(out1 - ref1_bf)))
    assert jnp.allclose(out1, ref1_f32, atol=2e-1, rtol=1e-1), \
        float(jnp.max(jnp.abs(out1 - ref1_f32)))

    # --- Test 2: larger graph -> row-tiled, megacore-parallel path -----------
    N2 = 384
    x2 = jax.random.normal(k_x2, (N2, IN_CH), jnp.float32)
    ei2, ew2 = _ring_graph(k_e2, N2)
    out2 = jax.block_until_ready(fwd(x2, ei2, ew2, params, row_block=128))
    assert out2.shape == (N2, 3 * OUT_CH), out2.shape
    ref2_bf = multichev_reference_bf16(x2, ei2, ew2, params)
    ref2_f32 = multichev_reference(x2, ei2, ew2, params)
    assert jnp.allclose(out2, ref2_bf, atol=2e-2, rtol=2e-2), \
        float(jnp.max(jnp.abs(out2 - ref2_bf)))
    assert jnp.allclose(out2, ref2_f32, atol=2e-1, rtol=1e-1), \
        float(jnp.max(jnp.abs(out2 - ref2_f32)))

    print("KERNEL_OK")
</pallas_src>

<mosaic_0001>
module attributes {stable_mosaic.version = 11 : i64} {
  func.func private @main(%arg0: i32) attributes {dimension_semantics = [#tpu.dimension_semantics<core_parallel>], iteration_bounds = array<i64: 2>, tpu.core_type = #tpu.core_type<sc_scalar_subcore>, window_params = []} {
    return
  }
}

module attributes {stable_mosaic.version = 11 : i64} {
  func.func private @main(%arg0: i32) attributes {dimension_semantics = [#tpu.dimension_semantics<core_parallel>], iteration_bounds = array<i64: 2>, tpu.core_type = #tpu.core_type<sc_scalar_subcore>, window_params = []} {
    return
  }
}

module attributes {stable_mosaic.version = 11 : i64} {
  func.func @_resident_kernel(%arg0: memref<128x8xbf16, #tpu.memory_space<vmem>>, %arg1: memref<128x128xbf16, #tpu.memory_space<vmem>>, %arg2: memref<3x8x1280xbf16, #tpu.memory_space<vmem>>, %arg3: memref<1x1280xf32, #tpu.memory_space<vmem>>, %arg4: memref<128x1280xf32, #tpu.memory_space<vmem>>) attributes {dimension_semantics = [], scalar_prefetch = 0 : i64, scratch_operands = 0 : i64, tpu.core_type = #tpu.core_type<tc>} {
    %c0 = arith.constant 0 : index
    %c0_0 = arith.constant 0 : index
    %0 = vector.load %arg0[%c0, %c0_0] : memref<128x8xbf16, #tpu.memory_space<vmem>>, vector<128x8xbf16>
    %c0_1 = arith.constant 0 : index
    %c0_2 = arith.constant 0 : index
    %1 = vector.load %arg1[%c0_1, %c0_2] : memref<128x128xbf16, #tpu.memory_space<vmem>>, vector<128x128xbf16>
    %cst = arith.constant dense<0.000000e+00> : vector<128x8xf32>
    %2 = tpu.matmul %1, %0, %cst {dimension_numbers = #tpu.dot_dimension_numbers<[1], [0], [0], [1], [0, 0, 1, 1], [], []>} : vector<128x128xbf16>, vector<128x8xbf16>, vector<128x8xf32> -> vector<128x8xf32>
    %3 = arith.truncf %2 : vector<128x8xf32> to vector<128x8xbf16>
    %cst_3 = arith.constant dense<0.000000e+00> : vector<128x8xf32>
    %4 = tpu.matmul %1, %3, %cst_3 {dimension_numbers = #tpu.dot_dimension_numbers<[1], [0], [0], [1], [0, 0, 1, 1], [], []>} : vector<128x128xbf16>, vector<128x8xbf16>, vector<128x8xf32> -> vector<128x8xf32>
    %cst_4 = arith.constant 2.000000e+00 : f32
    %5 = vector.broadcast %cst_4 : f32 to vector<128x8xf32>
    %6 = arith.mulf %5, %4 : vector<128x8xf32>
    %7 = arith.extf %0 : vector<128x8xbf16> to vector<128x8xf32>
    %8 = arith.subf %6, %7 : vector<128x8xf32>
    %c0_5 = arith.constant 0 : index
    %c0_6 = arith.constant 0 : index
    %c0_7 = arith.constant 0 : index
    %9 = vector.load %arg2[%c0_5, %c0_6, %c0_7] : memref<3x8x1280xbf16, #tpu.memory_space<vmem>>, vector<1x8x1280xbf16>
    %10 = vector.shape_cast %9 : vector<1x8x1280xbf16> to vector<8x1280xbf16>
    %cst_8 = arith.constant dense<0.000000e+00> : vector<128x1280xf32>
    %11 = tpu.matmul %0, %10, %cst_8 {dimension_numbers = #tpu.dot_dimension_numbers<[1], [0], [0], [1], [0, 0, 1, 1], [], []>} : vector<128x8xbf16>, vector<8x1280xbf16>, vector<128x1280xf32> -> vector<128x1280xf32>
    %c1 = arith.constant 1 : index
    %c0_9 = arith.constant 0 : index
    %c0_10 = arith.constant 0 : index
    %12 = vector.load %arg2[%c1, %c0_9, %c0_10] : memref<3x8x1280xbf16, #tpu.memory_space<vmem>>, vector<1x8x1280xbf16>
    %13 = vector.shape_cast %12 : vector<1x8x1280xbf16> to vector<8x1280xbf16>
    %cst_11 = arith.constant dense<0.000000e+00> : vector<128x1280xf32>
    %14 = tpu.matmul %3, %13, %cst_11 {dimension_numbers = #tpu.dot_dimension_numbers<[1], [0], [0], [1], [0, 0, 1, 1], [], []>} : vector<128x8xbf16>, vector<8x1280xbf16>, vector<128x1280xf32> -> vector<128x1280xf32>
    %15 = arith.addf %11, %14 : vector<128x1280xf32>
    %16 = arith.truncf %8 : vector<128x8xf32> to vector<128x8xbf16>
    %c2 = arith.constant 2 : index
    %c0_12 = arith.constant 0 : index
    %c0_13 = arith.constant 0 : index
    %17 = vector.load %arg2[%c2, %c0_12, %c0_13] : memref<3x8x1280xbf16, #tpu.memory_space<vmem>>, vector<1x8x1280xbf16>
    %18 = vector.shape_cast %17 : vector<1x8x1280xbf16> to vector<8x1280xbf16>
    %cst_14 = arith.constant dense<0.000000e+00> : vector<128x1280xf32>
    %19 = tpu.matmul %16, %18, %cst_14 {dimension_numbers = #tpu.dot_dimension_numbers<[1], [0], [0], [1], [0, 0, 1, 1], [], []>} : vector<128x8xbf16>, vector<8x1280xbf16>, vector<128x1280xf32> -> vector<128x1280xf32>
    %20 = arith.addf %15, %19 : vector<128x1280xf32>
    %c0_15 = arith.constant 0 : index
    %c0_16 = arith.constant 0 : index
    %21 = vector.load %arg3[%c0_15, %c0_16] : memref<1x1280xf32, #tpu.memory_space<vmem>>, vector<1x1280xf32>
    %22 = vector.broadcast %21 : vector<1x1280xf32> to vector<128x1280xf32>
    %23 = arith.addf %20, %22 : vector<128x1280xf32>
    %c0_17 = arith.constant 0 : index
    %c0_18 = arith.constant 0 : index
    %24 = vector.load %arg4[%c0_17, %c0_18] : memref<128x1280xf32, #tpu.memory_space<vmem>>, vector<128x1280xf32>
    tpu.vector_store %arg4[%c0_17, %c0_18], %23 {strides = array<i32>} : memref<128x1280xf32, #tpu.memory_space<vmem>>, vector<128x1280xf32>,
    return
  }
}

</mosaic_0001>

<llo_original>
// kernel: multichev_forward.1
$region0: #{multichev_forward.1}
  #allocation0 [shape = 'u32[]', space=smem, size = 0x4, offset = 0x4, fixed_abs, tag = 'smem constant byte address 0x4 - core index']
  #allocation1 [shape = 'u32[144,128]{1,0:T(1,128)}', space=vmem, size = 0x12000, scoped, tag = 'internal scratch']
  %s0 = inlined_call_operand.vmem [shape: bf16[128,8], index: 0, kind: input, shape index: {}]
  %s1 = inlined_call_operand.vmem [shape: bf16[128,128], index: 1, kind: input, shape index: {}]
  %s2 = inlined_call_operand.vmem [shape: bf16[3,8,1280], index: 2, kind: input, shape index: {}]
  %s3 = inlined_call_operand.vmem [shape: f32[1,1280], index: 3, kind: input, shape index: {}]
  %s4 = inlined_call_operand.vmem [shape: f32[128,1280], index: 4, kind: output, shape index: {}]
  %s5 = sld [smem:[#allocation0]]
  $region26: #{multichev_forward.1} parent=0
    _
  %s7 = ssub.s32 1, %s5
  %s8 = scalar_select 0, %s7, %s5
  // Predicated region
  $region2: #{multichev_forward.1} parent=0 // pred_check
    _
  $region3: #{multichev_forward.1} parent=0 // pred_check_branch
    %10 = sbr.rel (0) target = $region5
  $region4: #{multichev_forward.1} parent=0 // pred_region
    _
  $region5: #{multichev_forward.1} parent=0 // pred_fallthru
    _
  // Predicated region
  $region6: #{multichev_forward.1} parent=0 // pred_check
    _
  $region7: #{multichev_forward.1} parent=0 // pred_check_branch
    %12 = sbr.rel (0) target = $region9
  $region8: #{multichev_forward.1} parent=0 // pred_region
    _
  $region9: #{multichev_forward.1} parent=0 // pred_fallthru
    _
  // Predicated region
  $region10: #{multichev_forward.1} parent=0 // pred_check
    _
  $region11: #{multichev_forward.1} parent=0 // pred_check_branch
    %14 = sbr.rel (0) target = $region13
  $region12: #{multichev_forward.1} parent=0 // pred_region
    _
  $region13: #{multichev_forward.1} parent=0 // pred_fallthru
    _
  // Predicated region
  $region14: #{multichev_forward.1} parent=0 // pred_check
    _
  $region15: #{multichev_forward.1} parent=0 // pred_check_branch
    %16 = sbr.rel (0) target = $region17
  $region16: #{multichev_forward.1} parent=0 // pred_region
    _
  $region17: #{multichev_forward.1} parent=0 // pred_fallthru
    _
  %v18 = vld [vmem:[%s0] sm:$0xf]
  %v19 = vld [vmem:[%s0 + $0x4] sm:$0xf]
  %v20 = vld [vmem:[%s0 + $0x8] sm:$0xf]
  %v21 = vld [vmem:[%s0 + $0xc] sm:$0xf]
  %v22 = vld [vmem:[%s0 + $0x10] sm:$0xf]
  %v23 = vld [vmem:[%s0 + $0x14] sm:$0xf]
  %v24 = vld [vmem:[%s0 + $0x18] sm:$0xf]
  %v25 = vld [vmem:[%s0 + $0x1c] sm:$0xf]
  %v26 = vld [vmem:[%s0 + $0x20] sm:$0xf]
  %v27 = vld [vmem:[%s0 + $0x24] sm:$0xf]
  %v28 = vld [vmem:[%s0 + $0x28] sm:$0xf]
  %v29 = vld [vmem:[%s0 + $0x2c] sm:$0xf]
  %v30 = vld [vmem:[%s0 + $0x30] sm:$0xf]
  %v31 = vld [vmem:[%s0 + $0x34] sm:$0xf]
  %v32 = vld [vmem:[%s0 + $0x38] sm:$0xf]
  %v33 = vld [vmem:[%s0 + $0x3c] sm:$0xf]
  %v34 = vld [vmem:[%s1] sm:$0xf]
  %v35 = vld [vmem:[%s1 + $0x4] sm:$0xf]
  %v36 = vld [vmem:[%s1 + $0x8] sm:$0xf]
  %v37 = vld [vmem:[%s1 + $0xc] sm:$0xf]
  %v38 = vld [vmem:[%s1 + $0x10] sm:$0xf]
  %v39 = vld [vmem:[%s1 + $0x14] sm:$0xf]
  %v40 = vld [vmem:[%s1 + $0x18] sm:$0xf]
  %v41 = vld [vmem:[%s1 + $0x1c] sm:$0xf]
  %v42 = vld [vmem:[%s1 + $0x20] sm:$0xf]
  %v43 = vld [vmem:[%s1 + $0x24] sm:$0xf]
  %v44 = vld [vmem:[%s1 + $0x28] sm:$0xf]
  %v45 = vld [vmem:[%s1 + $0x2c] sm:$0xf]
  %v46 = vld [vmem:[%s1 + $0x30] sm:$0xf]
  %v47 = vld [vmem:[%s1 + $0x34] sm:$0xf]
  %v48 = vld [vmem:[%s1 + $0x38] sm:$0xf]
  %v49 = vld [vmem:[%s1 + $0x3c] sm:$0xf]
  %v66 = vunpack.c.l.b16 %v34
  %v67 = vunpack.c.l.b16 %v35
  %v68 = vunpack.c.l.b16 %v36
  %v69 = vunpack.c.l.b16 %v37
  %v70 = vunpack.c.l.b16 %v38
  %v71 = vunpack.c.l.b16 %v39
  %v72 = vunpack.c.l.b16 %v40
  %v73 = vunpack.c.l.b16 %v41
  %v74 = vunpack.c.l.b16 %v42
  %v75 = vunpack.c.l.b16 %v43
  %v76 = vunpack.c.l.b16 %v44
  %v77 = vunpack.c.l.b16 %v45
  %v78 = vunpack.c.l.b16 %v46
  %v79 = vunpack.c.l.b16 %v47
  %v80 = vunpack.c.l.b16 %v48
  %v81 = vunpack.c.l.b16 %v49
  %v82 = vpack.c.b16 %v67, %v66
  %v83 = vpack.c.b16 %v69, %v68
  %v84 = vpack.c.b16 %v71, %v70
  %v85 = vpack.c.b16 %v73, %v72
  %v86 = vpack.c.b16 %v75, %v74
  %v87 = vpack.c.b16 %v77, %v76
  %v88 = vpack.c.b16 %v79, %v78
  %v89 = vpack.c.b16 %v81, %v80
  %v114 = vunpack.c.l.b16 %v18
  %v115 = vunpack.c.l.b16 %v19
  %v116 = vunpack.c.l.b16 %v20
  %v117 = vunpack.c.l.b16 %v21
  %v118 = vunpack.c.l.b16 %v22
  %v119 = vunpack.c.l.b16 %v23
  %v120 = vunpack.c.l.b16 %v24
  %v121 = vunpack.c.l.b16 %v25
  %v122 = vunpack.c.l.b16 %v26
  %v123 = vunpack.c.l.b16 %v27
  %v124 = vunpack.c.l.b16 %v28
  %v125 = vunpack.c.l.b16 %v29
  %v126 = vunpack.c.l.b16 %v30
  %v127 = vunpack.c.l.b16 %v31
  %v128 = vunpack.c.l.b16 %v32
  %v129 = vunpack.c.l.b16 %v33
  %v130 = vpack.c.b16 %v115, %v114
  %v131 = vpack.c.b16 %v117, %v116
  %v132 = vpack.c.b16 %v119, %v118
  %v133 = vpack.c.b16 %v121, %v120
  %v134 = vpack.c.b16 %v123, %v122
  %v135 = vpack.c.b16 %v125, %v124
  %v136 = vpack.c.b16 %v127, %v126
  %v137 = vpack.c.b16 %v129, %v128
  %146 = vmatprep.subr.bf16.mxu0 0
  %147 = vmatpush1.bf16.msra.mxu0 %v130
  %148 = vmatprep.subr.bf16.mxu0 0
  %149 = vmatpush1.bf16.msra.mxu0 %v131
  %150 = vmatprep.subr.bf16.mxu0 0
  %151 = vmatpush1.bf16.msra.mxu0 %v132
  %152 = vmatprep.subr.bf16.mxu0 0
  %153 = vmatpush1.bf16.msra.mxu0 %v133
  %154 = vmatprep.subr.bf16.mxu0 0
  %155 = vmatpush1.bf16.msra.mxu0 %v134
  %156 = vmatprep.subr.bf16.mxu0 0
  %157 = vmatpush1.bf16.msra.mxu0 %v135
  %158 = vmatprep.subr.bf16.mxu0 0
  %159 = vmatpush1.bf16.msra.mxu0 %v136
  %160 = vmatprep.subr.bf16.mxu0 0
  %161 = vmatpush1.bf16.msra.mxu0 %v137
  %162 = vmatprep.subr.bf16.mxu0 0
  %163 = vmatpush1.bf16.msra.mxu0 0
  %164 = vmatprep.subr.bf16.mxu0 0
  %165 = vmatpush1.bf16.msra.mxu0 0
  %166 = vmatprep.subr.bf16.mxu0 0
  %167 = vmatpush1.bf16.msra.mxu0 0
  %168 = vmatprep.subr.bf16.mxu0 0
  %169 = vmatpush1.bf16.msra.mxu0 0
  %170 = vmatprep.subr.bf16.mxu0 0
  %171 = vmatpush1.bf16.msra.mxu0 0
  %172 = vmatprep.subr.bf16.mxu0 0
  %173 = vmatpush1.bf16.msra.mxu0 0
  %174 = vmatprep.subr.bf16.mxu0 0
  %175 = vmatpush1.bf16.msra.mxu0 0
  %176 = vmatprep.subr.bf16.mxu0 0
  %177 = vmatpush1.bf16.msra.mxu0 0
  %178 = vmatprep.mubr.bf16.mxu0 0
  %179 = vmatmul.mubr.bf16.gmra.mrb[0].mxu0 %v82
  %v180 = vpop.f32.mrb[0].mxu0
  %v181 = vadd.f32 0.0, %v180
  %v182 = vpop.f32.mrb[0].mxu0
  %v183 = vpop.f32.mrb[0].mxu0
  %v184 = vadd.f32 0.0, %v183
  %v185 = vpop.f32.mrb[0].mxu0
  %186 = vmatprep.mubr.bf16.mxu0 0
  %187 = vmatmul.mubr.bf16.gmra.mrb[0].mxu0 %v83
  %v188 = vpop.f32.mrb[0].mxu0
  %v189 = vadd.f32 0.0, %v188
  %v190 = vpop.f32.mrb[0].mxu0
  %v191 = vpop.f32.mrb[0].mxu0
  %v192 = vadd.f32 0.0, %v191
  %v193 = vpop.f32.mrb[0].mxu0
  %194 = vmatprep.mubr.bf16.mxu0 0
  %195 = vmatmul.mubr.bf16.gmra.mrb[0].mxu0 %v84
  %v196 = vpop.f32.mrb[0].mxu0
  %v197 = vadd.f32 0.0, %v196
  %v198 = vpop.f32.mrb[0].mxu0
  %v199 = vpop.f32.mrb[0].mxu0
  %v200 = vadd.f32 0.0, %v199
  %v201 = vpop.f32.mrb[0].mxu0
  %202 = vmatprep.mubr.bf16.mxu0 0
  %203 = vmatmul.mubr.bf16.gmra.mrb[0].mxu0 %v85
  %v204 = vpop.f32.mrb[0].mxu0
  %v205 = vadd.f32 0.0, %v204
  %v206 = vpop.f32.mrb[0].mxu0
  %v207 = vpop.f32.mrb[0].mxu0
  %v208 = vadd.f32 0.0, %v207
  %v209 = vpop.f32.mrb[0].mxu0
  %210 = vmatprep.mubr.bf16.mxu0 0
  %211 = vmatmul.mubr.bf16.gmra.mrb[0].mxu0 %v86
  %v212 = vpop.f32.mrb[0].mxu0
  %v213 = vadd.f32 0.0, %v212
  %v214 = vpop.f32.mrb[0].mxu0
  %v215 = vpop.f32.mrb[0].mxu0
  %v216 = vadd.f32 0.0, %v215
  %v217 = vpop.f32.mrb[0].mxu0
  %218 = vmatprep.mubr.bf16.mxu0 0
  %219 = vmatmul.mubr.bf16.gmra.mrb[0].mxu0 %v87
  %v220 = vpop.f32.mrb[0].mxu0
  %v221 = vadd.f32 0.0, %v220
  %v222 = vpop.f32.mrb[0].mxu0
  %v223 = vpop.f32.mrb[0].mxu0
  %v224 = vadd.f32 0.0, %v223
  %v225 = vpop.f32.mrb[0].mxu0
  %226 = vmatprep.mubr.bf16.mxu0 0
  %227 = vmatmul.mubr.bf16.gmra.mrb[0].mxu0 %v88
  %v228 = vpop.f32.mrb[0].mxu0
  %v229 = vadd.f32 0.0, %v228
  %v230 = vpop.f32.mrb[0].mxu0
  %v231 = vpop.f32.mrb[0].mxu0
  %v232 = vadd.f32 0.0, %v231
  %v233 = vpop.f32.mrb[0].mxu0
  %234 = vmatprep.mubr.bf16.mxu0 0
  %235 = vmatmul.mubr.bf16.gmra.mrb[0].mxu0 %v89
  %v236 = vpop.f32.mrb[0].mxu0
  %v237 = vadd.f32 0.0, %v236
  %v238 = vpop.f32.mrb[0].mxu0
  %v239 = vpop.f32.mrb[0].mxu0
  %v240 = vadd.f32 0.0, %v239
  %v241 = vpop.f32.mrb[0].mxu0
  %242 = vdwg.mxu0
  %v243 = vpack.c.bf16 %v184, %v181
  %v244 = vpack.c.bf16 %v192, %v189
  %v245 = vpack.c.bf16 %v200, %v197
  %v246 = vpack.c.bf16 %v208, %v205
  %v247 = vpack.c.bf16 %v216, %v213
  %v248 = vpack.c.bf16 %v224, %v221
  %v249 = vpack.c.bf16 %v232, %v229
  %v250 = vpack.c.bf16 %v240, %v237
  %251 = vmatprep.subr.bf16.mxu0 0
  %252 = vmatpush1.bf16.msra.mxu0 %v243
  %253 = vmatprep.subr.bf16.mxu0 0
  %254 = vmatpush1.bf16.msra.mxu0 %v244
  %255 = vmatprep.subr.bf16.mxu0 0
  %256 = vmatpush1.bf16.msra.mxu0 %v245
  %257 = vmatprep.subr.bf16.mxu0 0
  %258 = vmatpush1.bf16.msra.mxu0 %v246
  %259 = vmatprep.subr.bf16.mxu0 0
  %260 = vmatpush1.bf16.msra.mxu0 %v247
  %261 = vmatprep.subr.bf16.mxu0 0
  %262 = vmatpush1.bf16.msra.mxu0 %v248
  %263 = vmatprep.subr.bf16.mxu0 0
  %264 = vmatpush1.bf16.msra.mxu0 %v249
  %265 = vmatprep.subr.bf16.mxu0 0
  %266 = vmatpush1.bf16.msra.mxu0 %v250
  %267 = vmatprep.subr.bf16.mxu0 0
  %268 = vmatpush1.bf16.msra.mxu0 0
  %269 = vmatprep.subr.bf16.mxu0 0
  %270 = vmatpush1.bf16.msra.mxu0 0
  %271 = vmatprep.subr.bf16.mxu0 0
  %272 = vmatpush1.bf16.msra.mxu0 0
  %273 = vmatprep.subr.bf16.mxu0 0
  %274 = vmatpush1.bf16.msra.mxu0 0
  %275 = vmatprep.subr.bf16.mxu0 0
  %276 = vmatpush1.bf16.msra.mxu0 0
  %277 = vmatprep.subr.bf16.mxu0 0
  %278 = vmatpush1.bf16.msra.mxu0 0
  %279 = vmatprep.subr.bf16.mxu0 0
  %280 = vmatpush1.bf16.msra.mxu0 0
  %281 = vmatprep.subr.bf16.mxu0 0
  %282 = vmatpush1.bf16.msra.mxu0 0
  %283 = vmatprep.mubr.bf16.mxu0 0
  %284 = vmatmul.mubr.bf16.gmra.mrb[0].mxu0 %v82
  %v285 = vpop.f32.mrb[0].mxu0
  %v286 = vadd.f32 0.0, %v285
  %v287 = vpop.f32.mrb[0].mxu0
  %v288 = vpop.f32.mrb[0].mxu0
  %v289 = vadd.f32 0.0, %v288
  %v290 = vpop.f32.mrb[0].mxu0
  %291 = vmatprep.mubr.bf16.mxu0 0
  %292 = vmatmul.mubr.bf16.gmra.mrb[0].mxu0 %v83
  %v293 = vpop.f32.mrb[0].mxu0
  %v294 = vadd.f32 0.0, %v293
  %v295 = vpop.f32.mrb[0].mxu0
  %v296 = vpop.f32.mrb[0].mxu0
  %v297 = vadd.f32 0.0, %v296
  %v298 = vpop.f32.mrb[0].mxu0
  %299 = vmatprep.mubr.bf16.mxu0 0
  %300 = vmatmul.mubr.bf16.gmra.mrb[0].mxu0 %v84
  %v301 = vpop.f32.mrb[0].mxu0
  %v302 = vadd.f32 0.0, %v301
  %v303 = vpop.f32.mrb[0].mxu0
  %v304 = vpop.f32.mrb[0].mxu0
  %v305 = vadd.f32 0.0, %v304
  %v306 = vpop.f32.mrb[0].mxu0
  %307 = vmatprep.mubr.bf16.mxu0 0
  %308 = vmatmul.mubr.bf16.gmra.mrb[0].mxu0 %v85
  %v309 = vpop.f32.mrb[0].mxu0
  %v310 = vadd.f32 0.0, %v309
  %v311 = vpop.f32.mrb[0].mxu0
  %v312 = vpop.f32.mrb[0].mxu0
  %v313 = vadd.f32 0.0, %v312
  %v314 = vpop.f32.mrb[0].mxu0
  %315 = vmatprep.mubr.bf16.mxu0 0
  %316 = vmatmul.mubr.bf16.gmra.mrb[0].mxu0 %v86
  %v317 = vpop.f32.mrb[0].mxu0
  %v318 = vadd.f32 0.0, %v317
  %v319 = vpop.f32.mrb[0].mxu0
  %v320 = vpop.f32.mrb[0].mxu0
  %v321 = vadd.f32 0.0, %v320
  %v322 = vpop.f32.mrb[0].mxu0
  %323 = vmatprep.mubr.bf16.mxu0 0
  %324 = vmatmul.mubr.bf16.gmra.mrb[0].mxu0 %v87
  %v325 = vpop.f32.mrb[0].mxu0
  %v326 = vadd.f32 0.0, %v325
  %v327 = vpop.f32.mrb[0].mxu0
  %v328 = vpop.f32.mrb[0].mxu0
  %v329 = vadd.f32 0.0, %v328
  %v330 = vpop.f32.mrb[0].mxu0
  %331 = vmatprep.mubr.bf16.mxu0 0
  %332 = vmatmul.mubr.bf16.gmra.mrb[0].mxu0 %v88
  %v333 = vpop.f32.mrb[0].mxu0
  %v334 = vadd.f32 0.0, %v333
  %v335 = vpop.f32.mrb[0].mxu0
  %v336 = vpop.f32.mrb[0].mxu0
  %v337 = vadd.f32 0.0, %v336
  %v338 = vpop.f32.mrb[0].mxu0
  %339 = vmatprep.mubr.bf16.mxu0 0
  %340 = vmatmul.mubr.bf16.gmra.mrb[0].mxu0 %v89
  %v341 = vpop.f32.mrb[0].mxu0
  %v342 = vadd.f32 0.0, %v341
  %v343 = vpop.f32.mrb[0].mxu0
  %v344 = vpop.f32.mrb[0].mxu0
  %v345 = vadd.f32 0.0, %v344
  %v346 = vpop.f32.mrb[0].mxu0
  %347 = vdwg.mxu0
  %v348 = vmul.f32 %v286, 2.0
  %v349 = vmul.f32 %v289, 2.0
  %v350 = vmul.f32 %v294, 2.0
  %v351 = vmul.f32 %v297, 2.0
  %v352 = vmul.f32 %v302, 2.0
  %v353 = vmul.f32 %v305, 2.0
  %v354 = vmul.f32 %v310, 2.0
  %v355 = vmul.f32 %v313, 2.0
  %v356 = vmul.f32 %v318, 2.0
  %v357 = vmul.f32 %v321, 2.0
  %v358 = vmul.f32 %v326, 2.0
  %v359 = vmul.f32 %v329, 2.0
  %v360 = vmul.f32 %v334, 2.0
  %v361 = vmul.f32 %v337, 2.0
  %v362 = vmul.f32 %v342, 2.0
  %v363 = vmul.f32 %v345, 2.0
  %v364 = vunpack.c.l.bf16 %v18
  %v365 = vunpack.c.l.bf16 %v19
  %v366 = vunpack.c.l.bf16 %v20
  %v367 = vunpack.c.l.bf16 %v21
  %v368 = vunpack.c.l.bf16 %v22
  %v369 = vunpack.c.l.bf16 %v23
  %v370 = vunpack.c.l.bf16 %v24
  %v371 = vunpack.c.l.bf16 %v25
  %v372 = vunpack.c.l.bf16 %v26
  %v373 = vunpack.c.l.bf16 %v27
  %v374 = vunpack.c.l.bf16 %v28
  %v375 = vunpack.c.l.bf16 %v29
  %v376 = vunpack.c.l.bf16 %v30
  %v377 = vunpack.c.l.bf16 %v31
  %v378 = vunpack.c.l.bf16 %v32
  %v379 = vunpack.c.l.bf16 %v33
  %v380 = vsub.f32 %v348, %v364
  %v381 = vsub.f32 %v349, %v365
  %v382 = vsub.f32 %v350, %v366
  %v383 = vsub.f32 %v351, %v367
  %v384 = vsub.f32 %v352, %v368
  %v385 = vsub.f32 %v353, %v369
  %v386 = vsub.f32 %v354, %v370
  %v387 = vsub.f32 %v355, %v371
  %v388 = vsub.f32 %v356, %v372
  %v389 = vsub.f32 %v357, %v373
  %v390 = vsub.f32 %v358, %v374
  %v391 = vsub.f32 %v359, %v375
  %v392 = vsub.f32 %v360, %v376
  %v393 = vsub.f32 %v361, %v377
  %v394 = vsub.f32 %v362, %v378
  %v395 = vsub.f32 %v363, %v379
  %v396 = vld [vmem:[%s2] sm:$0xff]
  %v397 = vld [vmem:[%s2 + $0x8] sm:$0xff]
  %v398 = vld [vmem:[%s2 + $0x10] sm:$0xff]
  %v399 = vld [vmem:[%s2 + $0x18] sm:$0xff]
  %v400 = vld [vmem:[%s2 + $0x20] sm:$0xff]
  %s401 = scalar_lea.vmem %s2, 40
  %v402 = vld [vmem:[%s401] sm:$0xff]
  %v403 = vld [vmem:[%s401 + $0x8] sm:$0xff]
  %v404 = vld [vmem:[%s401 + $0x10] sm:$0xff]
  %v405 = vld [vmem:[%s401 + $0x18] sm:$0xff]
  %v406 = vld [vmem:[%s401 + $0x20] sm:$0xff]
  %v412 = vunpack.c.l.b16 %v402
  %v413 = vunpack.c.h.b16 %v402
  %v414 = vunpack.c.l.b16 %v403
  %v415 = vunpack.c.h.b16 %v403
  %v416 = vunpack.c.l.b16 %v404
  %v417 = vunpack.c.h.b16 %v404
  %v418 = vunpack.c.l.b16 %v405
  %v419 = vunpack.c.h.b16 %v405
  %v420 = vunpack.c.l.b16 %v406
  %v421 = vunpack.c.h.b16 %v406
  %v422 = vpack.c.b16 %v412, %v412
  %v423 = vpack.c.b16 %v413, %v413
  %v424 = vpack.c.b16 %v414, %v414
  %v425 = vpack.c.b16 %v415, %v415
  %v426 = vpack.c.b16 %v416, %v416
  %v427 = vpack.c.b16 %v417, %v417
  %v428 = vpack.c.b16 %v418, %v418
  %v429 = vpack.c.b16 %v419, %v419
  %v430 = vpack.c.b16 %v420, %v420
  %v431 = vpack.c.b16 %v421, %v421
  %vm432 = vcmask 64512
  %v434 = vsel %vm432, %v243, 0
  %v437 = vsel %vm432, %v244, 0
  %v440 = vsel %vm432, %v245, 0
  %v443 = vsel %vm432, %v246, 0
  %v446 = vsel %vm432, %v247, 0
  %v449 = vsel %vm432, %v248, 0
  %v452 = vsel %vm432, %v249, 0
  %v455 = vsel %vm432, %v250, 0
  %vm457 = vcmask 1043456
  %v459 = vsel %vm457, %v422, 0
  %v462 = vsel %vm457, %v423, 0
  %v465 = vsel %vm457, %v424, 0
  %v468 = vsel %vm457, %v425, 0
  %v471 = vsel %vm457, %v426, 0
  %v474 = vsel %vm457, %v427, 0
  %v477 = vsel %vm457, %v428, 0
  %v480 = vsel %vm457, %v429, 0
  %v483 = vsel %vm457, %v430, 0
  %v486 = vsel %vm457, %v431, 0
  %488 = vmatprep.subr.bf16.mxu0 %v462
  %489 = vmatpush1.bf16.msra.mxu0 %v459
  %490 = vmatprep.subr.bf16.mxu0 0
  %491 = vmatpush1.bf16.msra.mxu0 0
  %492 = vmatprep.subr.bf16.mxu0 0
  %493 = vmatpush1.bf16.msra.mxu0 0
  %494 = vmatprep.subr.bf16.mxu0 0
  %495 = vmatpush1.bf16.msra.mxu0 0
  %496 = vmatprep.subr.bf16.mxu0 0
  %497 = vmatpush1.bf16.msra.mxu0 0
  %498 = vmatprep.subr.bf16.mxu0 0
  %499 = vmatpush1.bf16.msra.mxu0 0
  %500 = vmatprep.subr.bf16.mxu0 0
  %501 = vmatpush1.bf16.msra.mxu0 0
  %502 = vmatprep.subr.bf16.mxu0 0
  %503 = vmatpush1.bf16.msra.mxu0 0
  %504 = vmatprep.subr.bf16.mxu0 0
  %505 = vmatpush1.bf16.msra.mxu0 0
  %506 = vmatprep.subr.bf16.mxu0 0
  %507 = vmatpush1.bf16.msra.mxu0 0
  %508 = vmatprep.subr.bf16.mxu0 0
  %509 = vmatpush1.bf16.msra.mxu0 0
  %510 = vmatprep.subr.bf16.mxu0 0
  %511 = vmatpush1.bf16.msra.mxu0 0
  %512 = vmatprep.subr.bf16.mxu0 0
  %513 = vmatpush1.bf16.msra.mxu0 0
  %514 = vmatprep.subr.bf16.mxu0 0
  %515 = vmatpush1.bf16.msra.mxu0 0
  %516 = vmatprep.subr.bf16.mxu0 0
  %517 = vmatpush1.bf16.msra.mxu0 0
  %518 = vmatprep.subr.bf16.mxu0 0
  %519 = vmatpush1.bf16.msra.mxu0 0
  %520 = vmatprep.mubr.bf16.mxu0 0
  %521 = vmatmul.mubr.bf16.gmra.mrb[0].mxu0 %v434
  %v522 = vpop.f32.mrb[0].mxu0
  %v523 = vadd.f32 0.0, %v522
  %v524 = vpop.f32.mrb[0].mxu0
  %v525 = vadd.f32 0.0, %v524
  %v526 = vpop.f32.mrb[0].mxu0
  %v527 = vadd.f32 0.0, %v526
  %v528 = vpop.f32.mrb[0].mxu0
  %v529 = vadd.f32 0.0, %v528
  %530 = vmatprep.mubr.bf16.mxu0 0
  %531 = vmatmul.mubr.bf16.gmra.mrb[0].mxu0 %v437
  %v532 = vpop.f32.mrb[0].mxu0
  %v533 = vadd.f32 0.0, %v532
  %v534 = vpop.f32.mrb[0].mxu0
  %v535 = vadd.f32 0.0, %v534
  %v536 = vpop.f32.mrb[0].mxu0
  %v537 = vadd.f32 0.0, %v536
  %v538 = vpop.f32.mrb[0].mxu0
  %v539 = vadd.f32 0.0, %v538
  %540 = vmatprep.mubr.bf16.mxu0 0
  %541 = vmatmul.mubr.bf16.gmra.mrb[0].mxu0 %v440
  %v542 = vpop.f32.mrb[0].mxu0
  %v543 = vadd.f32 0.0, %v542
  %v544 = vpop.f32.mrb[0].mxu0
  %v545 = vadd.f32 0.0, %v544
  %v546 = vpop.f32.mrb[0].mxu0
  %v547 = vadd.f32 0.0, %v546
  %v548 = vpop.f32.mrb[0].mxu0
  %v549 = vadd.f32 0.0, %v548
  %550 = vmatprep.mubr.bf16.mxu0 0
  %551 = vmatmul.mubr.bf16.gmra.mrb[0].mxu0 %v443
  %v552 = vpop.f32.mrb[0].mxu0
  %v553 = vadd.f32 0.0, %v552
  %v554 = vpop.f32.mrb[0].mxu0
  %v555 = vadd.f32 0.0, %v554
  %v556 = vpop.f32.mrb[0].mxu0
  %v557 = vadd.f32 0.0, %v556
  %v558 = vpop.f32.mrb[0].mxu0
  %v559 = vadd.f32 0.0, %v558
  %560 = vmatprep.mubr.bf16.mxu0 0
  %561 = vmatmul.mubr.bf16.gmra.mrb[0].mxu0 %v446
  %v562 = vpop.f32.mrb[0].mxu0
  %v563 = vadd.f32 0.0, %v562
  %v564 = vpop.f32.mrb[0].mxu0
  %v565 = vadd.f32 0.0, %v564
  %v566 = vpop.f32.mrb[0].mxu0
  %v567 = vadd.f32 0.0, %v566
  %v568 = vpop.f32.mrb[0].mxu0
  %v569 = vadd.f32 0.0, %v568
  %570 = vmatprep.mubr.bf16.mxu0 0
  %571 = vmatmul.mubr.bf16.gmra.mrb[0].mxu0 %v449
  %v572 = vpop.f32.mrb[0].mxu0
  %v573 = vadd.f32 0.0, %v572
  %v574 = vpop.f32.mrb[0].mxu0
  %v575 = vadd.f32 0.0, %v574
  %v576 = vpop.f32.mrb[0].mxu0
  %v577 = vadd.f32 0.0, %v576
  %v578 = vpop.f32.mrb[0].mxu0
  %v579 = vadd.f32 0.0, %v578
  %580 = vmatprep.mubr.bf16.mxu0 0
  %581 = vmatmul.mubr.bf16.gmra.mrb[0].mxu0 %v452
  %v582 = vpop.f32.mrb[0].mxu0
  %v583 = vadd.f32 0.0, %v582
  %v584 = vpop.f32.mrb[0].mxu0
  %v585 = vadd.f32 0.0, %v584
  %v586 = vpop.f32.mrb[0].mxu0
  %v587 = vadd.f32 0.0, %v586
  %v588 = vpop.f32.mrb[0].mxu0
  %v589 = vadd.f32 0.0, %v588
  %590 = vmatprep.mubr.bf16.mxu0 0
  %591 = vmatmul.mubr.bf16.gmra.mrb[0].mxu0 %v455
  %v592 = vpop.f32.mrb[0].mxu0
  %v593 = vadd.f32 0.0, %v592
  %v594 = vpop.f32.mrb[0].mxu0
  %v595 = vadd.f32 0.0, %v594
  %v596 = vpop.f32.mrb[0].mxu0
  %v597 = vadd.f32 0.0, %v596
  %v598 = vpop.f32.mrb[0].mxu0
  %v599 = vadd.f32 0.0, %v598
  %600 = vdwg.mxu0
  %601 = vmatprep.subr.bf16.mxu0 %v468
  %602 = vmatpush1.bf16.msra.mxu0 %v465
  %603 = vmatprep.subr.bf16.mxu0 0
  %604 = vmatpush1.bf16.msra.mxu0 0
  %605 = vmatprep.subr.bf16.mxu0 0
  %606 = vmatpush1.bf16.msra.mxu0 0
  %607 = vmatprep.subr.bf16.mxu0 0
  %608 = vmatpush1.bf16.msra.mxu0 0
  %609 = vmatprep.subr.bf16.mxu0 0
  %610 = vmatpush1.bf16.msra.mxu0 0
  %611 = vmatprep.subr.bf16.mxu0 0
  %612 = vmatpush1.bf16.msra.mxu0 0
  %613 = vmatprep.subr.bf16.mxu0 0
  %614 = vmatpush1.bf16.msra.mxu0 0
  %615 = vmatprep.subr.bf16.mxu0 0
  %616 = vmatpush1.bf16.msra.mxu0 0
  %617 = vmatprep.subr.bf16.mxu0 0
  %618 = vmatpush1.bf16.msra.mxu0 0
  %619 = vmatprep.subr.bf16.mxu0 0
  %620 = vmatpush1.bf16.msra.mxu0 0
  %621 = vmatprep.subr.bf16.mxu0 0
  %622 = vmatpush1.bf16.msra.mxu0 0
  %623 = vmatprep.subr.bf16.mxu0 0
  %624 = vmatpush1.bf16.msra.mxu0 0
  %625 = vmatprep.subr.bf16.mxu0 0
  %626 = vmatpush1.bf16.msra.mxu0 0
  %627 = vmatprep.subr.bf16.mxu0 0
  %628 = vmatpush1.bf16.msra.mxu0 0
  %629 = vmatprep.subr.bf16.mxu0 0
  %630 = vmatpush1.bf16.msra.mxu0 0
  %631 = vmatprep.subr.bf16.mxu0 0
  %632 = vmatpush1.bf16.msra.mxu0 0
  %633 = vmatprep.mubr.bf16.mxu0 0
  %634 = vmatmul.mubr.bf16.gmra.mrb[0].mxu0 %v434
  %v635 = vpop.f32.mrb[0].mxu0
  %v636 = vadd.f32 0.0, %v635
  %v637 = vpop.f32.mrb[0].mxu0
  %v638 = vadd.f32 0.0, %v637
  %v639 = vpop.f32.mrb[0].mxu0
  %v640 = vadd.f32 0.0, %v639
  %v641 = vpop.f32.mrb[0].mxu0
  %v642 = vadd.f32 0.0, %v641
  %643 = vmatprep.mubr.bf16.mxu0 0
  %644 = vmatmul.mubr.bf16.gmra.mrb[0].mxu0 %v437
  %v645 = vpop.f32.mrb[0].mxu0
  %v646 = vadd.f32 0.0, %v645
  %v647 = vpop.f32.mrb[0].mxu0
  %v648 = vadd.f32 0.0, %v647
  %v649 = vpop.f32.mrb[0].mxu0
  %v650 = vadd.f32 0.0, %v649
  %v651 = vpop.f32.mrb[0].mxu0
  %v652 = vadd.f32 0.0, %v651
  %653 = vmatprep.mubr.bf16.mxu0 0
  %654 = vmatmul.mubr.bf16.gmra.mrb[0].mxu0 %v440
  %v655 = vpop.f32.mrb[0].mxu0
  %v656 = vadd.f32 0.0, %v655
  %v657 = vpop.f32.mrb[0].mxu0
  %v658 = vadd.f32 0.0, %v657
  %v659 = vpop.f32.mrb[0].mxu0
  %v660 = vadd.f32 0.0, %v659
  %v661 = vpop.f32.mrb[0].mxu0
  %v662 = vadd.f32 0.0, %v661
  %663 = vmatprep.mubr.bf16.mxu0 0
  %664 = vmatmul.mubr.bf16.gmra.mrb[0].mxu0 %v443
  %v665 = vpop.f32.mrb[0].mxu0
  %v666 = vadd.f32 0.0, %v665
  %v667 = vpop.f32.mrb[0].mxu0
  %v668 = vadd.f32 0.0, %v667
  %v669 = vpop.f32.mrb[0].mxu0
  %v670 = vadd.f32 0.0, %v669
  %v671 = vpop.f32.mrb[0].mxu0
  %v672 = vadd.f32 0.0, %v671
  %673 = vmatprep.mubr.bf16.mxu0 0
  %674 = vmatmul.mubr.bf16.gmra.mrb[0].mxu0 %v446
  %v675 = vpop.f32.mrb[0].mxu0
  %v676 = vadd.f32 0.0, %v675
  %v677 = vpop.f32.mrb[0].mxu0
  %v678 = vadd.f32 0.0, %v677
  %v679 = vpop.f32.mrb[0].mxu0
  %v680 = vadd.f32 0.0, %v679
  %v681 = vpop.f32.mrb[0].mxu0
  %v682 = vadd.f32 0.0, %v681
  %683 = vmatprep.mubr.bf16.mxu0 0
  %684 = vmatmul.mubr.bf16.gmra.mrb[0].mxu0 %v449
  %v685 = vpop.f32.mrb[0].mxu0
  %v686 = vadd.f32 0.0, %v685
  %v687 = vpop.f32.mrb[0].mxu0
  %v688 = vadd.f32 0.0, %v687
  %v689 = vpop.f32.mrb[0].mxu0
  %v690 = vadd.f32 0.0, %v689
  %v691 = vpop.f32.mrb[0].mxu0
  %v692 = vadd.f32 0.0, %v691
  %693 = vmatprep.mubr.bf16.mxu0 0
  %694 = vmatmul.mubr.bf16.gmra.mrb[0].mxu0 %v452
  %v695 = vpop.f32.mrb[0].mxu0
  %v696 = vadd.f32 0.0, %v695
  %v697 = vpop.f32.mrb[0].mxu0
  %v698 = vadd.f32 0.0, %v697
  %v699 = vpop.f32.mrb[0].mxu0
  %v700 = vadd.f32 0.0, %v699
  %v701 = vpop.f32.mrb[0].mxu0
  %v702 = vadd.f32 0.0, %v701
  %703 = vmatprep.mubr.bf16.mxu0 0
  %704 = vmatmul.mubr.bf16.gmra.mrb[0].mxu0 %v455
  %v705 = vpop.f32.mrb[0].mxu0
  %v706 = vadd.f32 0.0, %v705
  %v707 = vpop.f32.mrb[0].mxu0
  %v708 = vadd.f32 0.0, %v707
  %v709 = vpop.f32.mrb[0].mxu0
  %v710 = vadd.f32 0.0, %v709
  %v711 = vpop.f32.mrb[0].mxu0
  %v712 = vadd.f32 0.0, %v711
  %713 = vdwg.mxu0
  %714 = vmatprep.subr.bf16.mxu0 %v474
  %715 = vmatpush1.bf16.msra.mxu0 %v471
  %716 = vmatprep.subr.bf16.mxu0 0
  %717 = vmatpush1.bf16.msra.mxu0 0
  %718 = vmatprep.subr.bf16.mxu0 0
  %719 = vmatpush1.bf16.msra.mxu0 0
  %720 = vmatprep.subr.bf16.mxu0 0
  %721 = vmatpush1.bf16.msra.mxu0 0
  %722 = vmatprep.subr.bf16.mxu0 0
  %723 = vmatpush1.bf16.msra.mxu0 0
  %724 = vmatprep.subr.bf16.mxu0 0
  %725 = vmatpush1.bf16.msra.mxu0 0
  %726 = vmatprep.subr.bf16.mxu0 0
  %727 = vmatpush1.bf16.msra.mxu0 0
  %728 = vmatprep.subr.bf16.mxu0 0
  %729 = vmatpush1.bf16.msra.mxu0 0
  %730 = vmatprep.subr.bf16.mxu0 0
  %731 = vmatpush1.bf16.msra.mxu0 0
  %732 = vmatprep.subr.bf16.mxu0 0
  %733 = vmatpush1.bf16.msra.mxu0 0
  %734 = vmatprep.subr.bf16.mxu0 0
  %735 = vmatpush1.bf16.msra.mxu0 0
  %736 = vmatprep.subr.bf16.mxu0 0
  %737 = vmatpush1.bf16.msra.mxu0 0
  %738 = vmatprep.subr.bf16.mxu0 0
  %739 = vmatpush1.bf16.msra.mxu0 0
  %740 = vmatprep.subr.bf16.mxu0 0
  %741 = vmatpush1.bf16.msra.mxu0 0
  %742 = vmatprep.subr.bf16.mxu0 0
  %743 = vmatpush1.bf16.msra.mxu0 0
  %744 = vmatprep.subr.bf16.mxu0 0
  %745 = vmatpush1.bf16.msra.mxu0 0
  %746 = vmatprep.mubr.bf16.mxu0 0
  %747 = vmatmul.mubr.bf16.gmra.mrb[0].mxu0 %v434
  %v748 = vpop.f32.mrb[0].mxu0
  %v749 = vadd.f32 0.0, %v748
  %v750 = vpop.f32.mrb[0].mxu0
  %v751 = vadd.f32 0.0, %v750
  %v752 = vpop.f32.mrb[0].mxu0
  %v753 = vadd.f32 0.0, %v752
  %v754 = vpop.f32.mrb[0].mxu0
  %v755 = vadd.f32 0.0, %v754
  %756 = vmatprep.mubr.bf16.mxu0 0
  %757 = vmatmul.mubr.bf16.gmra.mrb[0].mxu0 %v437
  %v758 = vpop.f32.mrb[0].mxu0
  %v759 = vadd.f32 0.0, %v758
  %v760 = vpop.f32.mrb[0].mxu0
  %v761 = vadd.f32 0.0, %v760
  %v762 = vpop.f32.mrb[0].mxu0
  %v763 = vadd.f32 0.0, %v762
  %v764 = vpop.f32.mrb[0].mxu0
  %v765 = vadd.f32 0.0, %v764
  %766 = vmatprep.mubr.bf16.mxu0 0
  %767 = vmatmul.mubr.bf16.gmra.mrb[0].mxu0 %v440
  %v768 = vpop.f32.mrb[0].mxu0
  %v769 = vadd.f32 0.0, %v768
  %v770 = vpop.f32.mrb[0].mxu0
  %v771 = vadd.f32 0.0, %v770
  %v772 = vpop.f32.mrb[0].mxu0
  %v773 = vadd.f32 0.0, %v772
  %v774 = vpop.f32.mrb[0].mxu0
  %v775 = vadd.f32 0.0, %v774
  %776 = vmatprep.mubr.bf16.mxu0 0
  %777 = vmatmul.mubr.bf16.gmra.mrb[0].mxu0 %v443
  %v778 = vpop.f32.mrb[0].mxu0
  %v779 = vadd.f32 0.0, %v778
  %v780 = vpop.f32.mrb[0].mxu0
  %v781 = vadd.f32 0.0, %v780
  %v782 = vpop.f32.mrb[0].mxu0
  %v783 = vadd.f32 0.0, %v782
  %v784 = vpop.f32.mrb[0].mxu0
  %v785 = vadd.f32 0.0, %v784
  %786 = vmatprep.mubr.bf16.mxu0 0
  %787 = vmatmul.mubr.bf16.gmra.mrb[0].mxu0 %v446
  %v788 = vpop.f32.mrb[0].mxu0
  %v789 = vadd.f32 0.0, %v788
  %v790 = vpop.f32.mrb[0].mxu0
  %v791 = vadd.f32 0.0, %v790
  %v792 = vpop.f32.mrb[0].mxu0
  %v793 = vadd.f32 0.0, %v792
  %v794 = vpop.f32.mrb[0].mxu0
  %v795 = vadd.f32 0.0, %v794
  %796 = vmatprep.mubr.bf16.mxu0 0
  %797 = vmatmul.mubr.bf16.gmra.mrb[0].mxu0 %v449
  %v798 = vpop.f32.mrb[0].mxu0
  %v799 = vadd.f32 0.0, %v798
  %v800 = vpop.f32.mrb[0].mxu0
  %v801 = vadd.f32 0.0, %v800
  %v802 = vpop.f32.mrb[0].mxu0
  %v803 = vadd.f32 0.0, %v802
  %v804 = vpop.f32.mrb[0].mxu0
  %v805 = vadd.f32 0.0, %v804
  %806 = vmatprep.mubr.bf16.mxu0 0
  %807 = vmatmul.mubr.bf16.gmra.mrb[0].mxu0 %v452
  %v808 = vpop.f32.mrb[0].mxu0
  %v809 = vadd.f32 0.0, %v808
  %v810 = vpop.f32.mrb[0].mxu0
  %v811 = vadd.f32 0.0, %v810
  %v812 = vpop.f32.mrb[0].mxu0
  %v813 = vadd.f32 0.0, %v812
  %v814 = vpop.f32.mrb[0].mxu0
  %v815 = vadd.f32 0.0, %v814
  %816 = vmatprep.mubr.bf16.mxu0 0
  %817 = vmatmul.mubr.bf16.gmra.mrb[0].mxu0 %v455
  %v818 = vpop.f32.mrb[0].mxu0
  %v819 = vadd.f32 0.0, %v818
  %v820 = vpop.f32.mrb[0].mxu0
  %v821 = vadd.f32 0.0, %v820
  %v822 = vpop.f32.mrb[0].mxu0
  %v823 = vadd.f32 0.0, %v822
  %v824 = vpop.f32.mrb[0].mxu0
  %v825 = vadd.f32 0.0, %v824
  %826 = vdwg.mxu0
  %827 = vmatprep.subr.bf16.mxu0 %v480
  %828 = vmatpush1.bf16.msra.mxu0 %v477
  %829 = vmatprep.subr.bf16.mxu0 0
  %830 = vmatpush1.bf16.msra.mxu0 0
  %831 = vmatprep.subr.bf16.mxu0 0
  %832 = vmatpush1.bf16.msra.mxu0 0
  %833 = vmatprep.subr.bf16.mxu0 0
  %834 = vmatpush1.bf16.msra.mxu0 0
  %835 = vmatprep.subr.bf16.mxu0 0
  %836 = vmatpush1.bf16.msra.mxu0 0
  %837 = vmatprep.subr.bf16.mxu0 0
  %838 = vmatpush1.bf16.msra.mxu0 0
  %839 = vmatprep.subr.bf16.mxu0 0
  %840 = vmatpush1.bf16.msra.mxu0 0
  %841 = vmatprep.subr.bf16.mxu0 0
  %842 = vmatpush1.bf16.msra.mxu0 0
  %843 = vmatprep.subr.bf16.mxu0 0
  %844 = vmatpush1.bf16.msra.mxu0 0
  %845 = vmatprep.subr.bf16.mxu0 0
  %846 = vmatpush1.bf16.msra.mxu0 0
  %847 = vmatprep.subr.bf16.mxu0 0
  %848 = vmatpush1.bf16.msra.mxu0 0
  %849 = vmatprep.subr.bf16.mxu0 0
  %850 = vmatpush1.bf16.msra.mxu0 0
  %851 = vmatprep.subr.bf16.mxu0 0
  %852 = vmatpush1.bf16.msra.mxu0 0
  %853 = vmatprep.subr.bf16.mxu0 0
  %854 = vmatpush1.bf16.msra.mxu0 0
  %855 = vmatprep.subr.bf16.mxu0 0
  %856 = vmatpush1.bf16.msra.mxu0 0
  %857 = vmatprep.subr.bf16.mxu0 0
  %858 = vmatpush1.bf16.msra.mxu0 0
  %859 = vmatprep.mubr.bf16.mxu0 0
  %860 = vmatmul.mubr.bf16.gmra.mrb[0].mxu0 %v434
  %v861 = vpop.f32.mrb[0].mxu0
  %v862 = vadd.f32 0.0, %v861
  %v863 = vpop.f32.mrb[0].mxu0
  %v864 = vadd.f32 0.0, %v863
  %v865 = vpop.f32.mrb[0].mxu0
  %v866 = vadd.f32 0.0, %v865
  %v867 = vpop.f32.mrb[0].mxu0
  %v868 = vadd.f32 0.0, %v867
  %869 = vmatprep.mubr.bf16.mxu0 0
  %870 = vmatmul.mubr.bf16.gmra.mrb[0].mxu0 %v437
  %v871 = vpop.f32.mrb[0].mxu0
  %v872 = vadd.f32 0.0, %v871
  %v873 = vpop.f32.mrb[0].mxu0
  %v874 = vadd.f32 0.0, %v873
  %v875 = vpop.f32.mrb[0].mxu0
  %v876 = vadd.f32 0.0, %v875
  %v877 = vpop.f32.mrb[0].mxu0
  %v878 = vadd.f32 0.0, %v877
  %879 = vmatprep.mubr.bf16.mxu0 0
  %880 = vmatmul.mubr.bf16.gmra.mrb[0].mxu0 %v440
  %v881 = vpop.f32.mrb[0].mxu0
  %v882 = vadd.f32 0.0, %v881
  %v883 = vpop.f32.mrb[0].mxu0
  %v884 = vadd.f32 0.0, %v883
  %v885 = vpop.f32.mrb[0].mxu0
  %v886 = vadd.f32 0.0, %v885
  %v887 = vpop.f32.mrb[0].mxu0
  %v888 = vadd.f32 0.0, %v887
  %889 = vmatprep.mubr.bf16.mxu0 0
  %890 = vmatmul.mubr.bf16.gmra.mrb[0].mxu0 %v443
  %v891 = vpop.f32.mrb[0].mxu0
  %v892 = vadd.f32 0.0, %v891
  %v893 = vpop.f32.mrb[0].mxu0
  %v894 = vadd.f32 0.0, %v893
  %v895 = vpop.f32.mrb[0].mxu0
  %v896 = vadd.f32 0.0, %v895
  %v897 = vpop.f32.mrb[0].mxu0
  %v898 = vadd.f32 0.0, %v897
  %899 = vmatprep.mubr.bf16.mxu0 0
  %900 = vmatmul.mubr.bf16.gmra.mrb[0].mxu0 %v446
  %v901 = vpop.f32.mrb[0].mxu0
  %v902 = vadd.f32 0.0, %v901
  %v903 = vpop.f32.mrb[0].mxu0
  %v904 = vadd.f32 0.0, %v903
  %v905 = vpop.f32.mrb[0].mxu0
  %v906 = vadd.f32 0.0, %v905
  %v907 = vpop.f32.mrb[0].mxu0
  %v908 = vadd.f32 0.0, %v907
  %909 = vmatprep.mubr.bf16.mxu0 0
  %910 = vmatmul.mubr.bf16.gmra.mrb[0].mxu0 %v449
  %v911 = vpop.f32.mrb[0].mxu0
  %v912 = vadd.f32 0.0, %v911
  %v913 = vpop.f32.mrb[0].mxu0
  %v914 = vadd.f32 0.0, %v913
  %v915 = vpop.f32.mrb[0].mxu0
  %v916 = vadd.f32 0.0, %v915
  %v917 = vpop.f32.mrb[0].mxu0
  %v918 = vadd.f32 0.0, %v917
  %919 = vmatprep.mubr.bf16.mxu0 0
  %920 = vmatmul.mubr.bf16.gmra.mrb[0].mxu0 %v452
  %v921 = vpop.f32.mrb[0].mxu0
  %v922 = vadd.f32 0.0, %v921
  %v923 = vpop.f32.mrb[0].mxu0
  %v924 = vadd.f32 0.0, %v923
  %v925 = vpop.f32.mrb[0].mxu0
  %v926 = vadd.f32 0.0, %v925
  %v927 = vpop.f32.mrb[0].mxu0
  %v928 = vadd.f32 0.0, %v927
  %929 = vmatprep.mubr.bf16.mxu0 0
  %930 = vmatmul.mubr.bf16.gmra.mrb[0].mxu0 %v455
  %v931 = vpop.f32.mrb[0].mxu0
  %v932 = vadd.f32 0.0, %v931
  %v933 = vpop.f32.mrb[0].mxu0
  %v934 = vadd.f32 0.0, %v933
  %v935 = vpop.f32.mrb[0].mxu0
  %v936 = vadd.f32 0.0, %v935
  %v937 = vpop.f32.mrb[0].mxu0
  %v938 = vadd.f32 0.0, %v937
  %939 = vdwg.mxu0
  %940 = vmatprep.subr.bf16.mxu0 %v486
  %941 = vmatpush1.bf16.msra.mxu0 %v483
  %942 = vmatprep.subr.bf16.mxu0 0
  %943 = vmatpush1.bf16.msra.mxu0 0
  %944 = vmatprep.subr.bf16.mxu0 0
  %945 = vmatpush1.bf16.msra.mxu0 0
  %946 = vmatprep.subr.bf16.mxu0 0
  %947 = vmatpush1.bf16.msra.mxu0 0
  %948 = vmatprep.subr.bf16.mxu0 0
  %949 = vmatpush1.bf16.msra.mxu0 0
  %950 = vmatprep.subr.bf16.mxu0 0
  %951 = vmatpush1.bf16.msra.mxu0 0
  %952 = vmatprep.subr.bf16.mxu0 0
  %953 = vmatpush1.bf16.msra.mxu0 0
  %954 = vmatprep.subr.bf16.mxu0 0
  %955 = vmatpush1.bf16.msra.mxu0 0
  %956 = vmatprep.subr.bf16.mxu0 0
  %957 = vmatpush1.bf16.msra.mxu0 0
  %958 = vmatprep.subr.bf16.mxu0 0
  %959 = vmatpush1.bf16.msra.mxu0 0
  %960 = vmatprep.subr.bf16.mxu0 0
  %961 = vmatpush1.bf16.msra.mxu0 0
  %962 = vmatprep.subr.bf16.mxu0 0
  %963 = vmatpush1.bf16.msra.mxu0 0
  %964 = vmatprep.subr.bf16.mxu0 0
  %965 = vmatpush1.bf16.msra.mxu0 0
  %966 = vmatprep.subr.bf16.mxu0 0
  %967 = vmatpush1.bf16.msra.mxu0 0
  %968 = vmatprep.subr.bf16.mxu0 0
  %969 = vmatpush1.bf16.msra.mxu0 0
  %970 = vmatprep.subr.bf16.mxu0 0
  %971 = vmatpush1.bf16.msra.mxu0 0
  %972 = vmatprep.mubr.bf16.mxu0 0
  %973 = vmatmul.mubr.bf16.gmra.mrb[0].mxu0 %v434
  %v974 = vpop.f32.mrb[0].mxu0
  %v975 = vadd.f32 0.0, %v974
  %v976 = vpop.f32.mrb[0].mxu0
  %v977 = vadd.f32 0.0, %v976
  %v978 = vpop.f32.mrb[0].mxu0
  %v979 = vadd.f32 0.0, %v978
  %v980 = vpop.f32.mrb[0].mxu0
  %v981 = vadd.f32 0.0, %v980
  %982 = vmatprep.mubr.bf16.mxu0 0
  %983 = vmatmul.mubr.bf16.gmra.mrb[0].mxu0 %v437
  %v984 = vpop.f32.mrb[0].mxu0
  %v985 = vadd.f32 0.0, %v984
  %v986 = vpop.f32.mrb[0].mxu0
  %v987 = vadd.f32 0.0, %v986
  %v988 = vpop.f32.mrb[0].mxu0
  %v989 = vadd.f32 0.0, %v988
  %v990 = vpop.f32.mrb[0].mxu0
  %v991 = vadd.f32 0.0, %v990
  %992 = vmatprep.mubr.bf16.mxu0 0
  %993 = vmatmul.mubr.bf16.gmra.mrb[0].mxu0 %v440
  %v994 = vpop.f32.mrb[0].mxu0
  %v995 = vadd.f32 0.0, %v994
  %v996 = vpop.f32.mrb[0].mxu0
  %v997 = vadd.f32 0.0, %v996
  %v998 = vpop.f32.mrb[0].mxu0
  %v999 = vadd.f32 0.0, %v998
  %v1000 = vpop.f32.mrb[0].mxu0
  %v1001 = vadd.f32 0.0, %v1000
  %1002 = vmatprep.mubr.bf16.mxu0 0
  %1003 = vmatmul.mubr.bf16.gmra.mrb[0].mxu0 %v443
  %v1004 = vpop.f32.mrb[0].mxu0
  %v1005 = vadd.f32 0.0, %v1004
  %v1006 = vpop.f32.mrb[0].mxu0
  %v1007 = vadd.f32 0.0, %v1006
  %v1008 = vpop.f32.mrb[0].mxu0
  %v1009 = vadd.f32 0.0, %v1008
  %v1010 = vpop.f32.mrb[0].mxu0
  %v1011 = vadd.f32 0.0, %v1010
  %1012 = vmatprep.mubr.bf16.mxu0 0
  %1013 = vmatmul.mubr.bf16.gmra.mrb[0].mxu0 %v446
  %v1014 = vpop.f32.mrb[0].mxu0
  %v1015 = vadd.f32 0.0, %v1014
  %v1016 = vpop.f32.mrb[0].mxu0
  %v1017 = vadd.f32 0.0, %v1016
  %v1018 = vpop.f32.mrb[0].mxu0
  %v1019 = vadd.f32 0.0, %v1018
  %v1020 = vpop.f32.mrb[0].mxu0
  %v1021 = vadd.f32 0.0, %v1020
  %1022 = vmatprep.mubr.bf16.mxu0 0
  %1023 = vmatmul.mubr.bf16.gmra.mrb[0].mxu0 %v449
  %v1024 = vpop.f32.mrb[0].mxu0
  %v1025 = vadd.f32 0.0, %v1024
  %v1026 = vpop.f32.mrb[0].mxu0
  %v1027 = vadd.f32 0.0, %v1026
  %v1028 = vpop.f32.mrb[0].mxu0
  %v1029 = vadd.f32 0.0, %v1028
  %v1030 = vpop.f32.mrb[0].mxu0
  %v1031 = vadd.f32 0.0, %v1030
  %1032 = vmatprep.mubr.bf16.mxu0 0
  %1033 = vmatmul.mubr.bf16.gmra.mrb[0].mxu0 %v452
  %v1034 = vpop.f32.mrb[0].mxu0
  %v1035 = vadd.f32 0.0, %v1034
  %v1036 = vpop.f32.mrb[0].mxu0
  %v1037 = vadd.f32 0.0, %v1036
  %v1038 = vpop.f32.mrb[0].mxu0
  %v1039 = vadd.f32 0.0, %v1038
  %v1040 = vpop.f32.mrb[0].mxu0
  %v1041 = vadd.f32 0.0, %v1040
  %1042 = vmatprep.mubr.bf16.mxu0 0
  %1043 = vmatmul.mubr.bf16.gmra.mrb[0].mxu0 %v455
  %v1044 = vpop.f32.mrb[0].mxu0
  %v1045 = vadd.f32 0.0, %v1044
  %v1046 = vpop.f32.mrb[0].mxu0
  %v1047 = vadd.f32 0.0, %v1046
  %v1048 = vpop.f32.mrb[0].mxu0
  %v1049 = vadd.f32 0.0, %v1048
  %v1050 = vpop.f32.mrb[0].mxu0
  %v1051 = vadd.f32 0.0, %v1050
  %1052 = vdwg.mxu0
  %v1058 = vunpack.c.l.b16 %v396
  %v1059 = vunpack.c.h.b16 %v396
  %v1060 = vunpack.c.l.b16 %v397
  %v1061 = vunpack.c.h.b16 %v397
  %v1062 = vunpack.c.l.b16 %v398
  %v1063 = vunpack.c.h.b16 %v398
  %v1064 = vunpack.c.l.b16 %v399
  %v1065 = vunpack.c.h.b16 %v399
  %v1066 = vunpack.c.l.b16 %v400
  %v1067 = vunpack.c.h.b16 %v400
  %v1068 = vpack.c.b16 %v1058, %v1058
  %v1069 = vpack.c.b16 %v1059, %v1059
  %v1070 = vpack.c.b16 %v1060, %v1060
  %v1071 = vpack.c.b16 %v1061, %v1061
  %v1072 = vpack.c.b16 %v1062, %v1062
  %v1073 = vpack.c.b16 %v1063, %v1063
  %v1074 = vpack.c.b16 %v1064, %v1064
  %v1075 = vpack.c.b16 %v1065, %v1065
  %v1076 = vpack.c.b16 %v1066, %v1066
  %v1077 = vpack.c.b16 %v1067, %v1067
  %v1079 = vsel %vm432, %v130, 0
  %v1082 = vsel %vm432, %v131, 0
  %v1085 = vsel %vm432, %v132, 0
  %v1088 = vsel %vm432, %v133, 0
  %v1091 = vsel %vm432, %v134, 0
  %v1094 = vsel %vm432, %v135, 0
  %v1097 = vsel %vm432, %v136, 0
  %v1100 = vsel %vm432, %v137, 0
  %v1103 = vsel %vm457, %v1068, 0
  %v1106 = vsel %vm457, %v1069, 0
  %v1109 = vsel %vm457, %v1070, 0
  %v1112 = vsel %vm457, %v1071, 0
  %v1115 = vsel %vm457, %v1072, 0
  %v1118 = vsel %vm457, %v1073, 0
  %v1121 = vsel %vm457, %v1074, 0
  %v1124 = vsel %vm457, %v1075, 0
  %v1127 = vsel %vm457, %v1076, 0
  %v1130 = vsel %vm457, %v1077, 0
  %1132 = vmatprep.subr.bf16.mxu0 %v1106
  %1133 = vmatpush1.bf16.msra.mxu0 %v1103
  %1134 = vmatprep.subr.bf16.mxu0 0
  %1135 = vmatpush1.bf16.msra.mxu0 0
  %1136 = vmatprep.subr.bf16.mxu0 0
  %1137 = vmatpush1.bf16.msra.mxu0 0
  %1138 = vmatprep.subr.bf16.mxu0 0
  %1139 = vmatpush1.bf16.msra.mxu0 0
  %1140 = vmatprep.subr.bf16.mxu0 0
  %1141 = vmatpush1.bf16.msra.mxu0 0
  %1142 = vmatprep.subr.bf16.mxu0 0
  %1143 = vmatpush1.bf16.msra.mxu0 0
  %1144 = vmatprep.subr.bf16.mxu0 0
  %1145 = vmatpush1.bf16.msra.mxu0 0
  %1146 = vmatprep.subr.bf16.mxu0 0
  %1147 = vmatpush1.bf16.msra.mxu0 0
  %1148 = vmatprep.subr.bf16.mxu0 0
  %1149 = vmatpush1.bf16.msra.mxu0 0
  %1150 = vmatprep.subr.bf16.mxu0 0
  %1151 = vmatpush1.bf16.msra.mxu0 0
  %1152 = vmatprep.subr.bf16.mxu0 0
  %1153 = vmatpush1.bf16.msra.mxu0 0
  %1154 = vmatprep.subr.bf16.mxu0 0
  %1155 = vmatpush1.bf16.msra.mxu0 0
  %1156 = vmatprep.subr.bf16.mxu0 0
  %1157 = vmatpush1.bf16.msra.mxu0 0
  %1158 = vmatprep.subr.bf16.mxu0 0
  %1159 = vmatpush1.bf16.msra.mxu0 0
  %1160 = vmatprep.subr.bf16.mxu0 0
  %1161 = vmatpush1.bf16.msra.mxu0 0
  %1162 = vmatprep.subr.bf16.mxu0 0
  %1163 = vmatpush1.bf16.msra.mxu0 0
  %1164 = vmatprep.mubr.bf16.mxu0 0
  %1165 = vmatmul.mubr.bf16.gmra.mrb[0].mxu0 %v1079
  %v1166 = vpop.f32.mrb[0].mxu0
  %v1167 = vadd.f32 %v523, %v1166
  %v1168 = vpop.f32.mrb[0].mxu0
  %v1169 = vadd.f32 %v525, %v1168
  %v1170 = vpop.f32.mrb[0].mxu0
  %v1171 = vadd.f32 %v527, %v1170
  %v1172 = vpop.f32.mrb[0].mxu0
  %v1173 = vadd.f32 %v529, %v1172
  %1174 = vmatprep.mubr.bf16.mxu0 0
  %1175 = vmatmul.mubr.bf16.gmra.mrb[0].mxu0 %v1082
  %v1176 = vpop.f32.mrb[0].mxu0
  %v1177 = vadd.f32 %v533, %v1176
  %v1178 = vpop.f32.mrb[0].mxu0
  %v1179 = vadd.f32 %v535, %v1178
  %v1180 = vpop.f32.mrb[0].mxu0
  %v1181 = vadd.f32 %v537, %v1180
  %v1182 = vpop.f32.mrb[0].mxu0
  %v1183 = vadd.f32 %v539, %v1182
  %1184 = vmatprep.mubr.bf16.mxu0 0
  %1185 = vmatmul.mubr.bf16.gmra.mrb[0].mxu0 %v1085
  %v1186 = vpop.f32.mrb[0].mxu0
  %v1187 = vadd.f32 %v543, %v1186
  %v1188 = vpop.f32.mrb[0].mxu0
  %v1189 = vadd.f32 %v545, %v1188
  %v1190 = vpop.f32.mrb[0].mxu0
  %v1191 = vadd.f32 %v547, %v1190
  %v1192 = vpop.f32.mrb[0].mxu0
  %v1193 = vadd.f32 %v549, %v1192
  %1194 = vmatprep.mubr.bf16.mxu0 0
  %1195 = vmatmul.mubr.bf16.gmra.mrb[0].mxu0 %v1088
  %v1196 = vpop.f32.mrb[0].mxu0
  %v1197 = vadd.f32 %v553, %v1196
  %v1198 = vpop.f32.mrb[0].mxu0
  %v1199 = vadd.f32 %v555, %v1198
  %v1200 = vpop.f32.mrb[0].mxu0
  %v1201 = vadd.f32 %v557, %v1200
  %v1202 = vpop.f32.mrb[0].mxu0
  %v1203 = vadd.f32 %v559, %v1202
  %1204 = vmatprep.mubr.bf16.mxu0 0
  %1205 = vmatmul.mubr.bf16.gmra.mrb[0].mxu0 %v1091
  %v1206 = vpop.f32.mrb[0].mxu0
  %v1207 = vadd.f32 %v563, %v1206
  %v1208 = vpop.f32.mrb[0].mxu0
  %v1209 = vadd.f32 %v565, %v1208
  %v1210 = vpop.f32.mrb[0].mxu0
  %v1211 = vadd.f32 %v567, %v1210
  %v1212 = vpop.f32.mrb[0].mxu0
  %v1213 = vadd.f32 %v569, %v1212
  %1214 = vmatprep.mubr.bf16.mxu0 0
  %1215 = vmatmul.mubr.bf16.gmra.mrb[0].mxu0 %v1094
  %v1216 = vpop.f32.mrb[0].mxu0
  %v1217 = vadd.f32 %v573, %v1216
  %v1218 = vpop.f32.mrb[0].mxu0
  %v1219 = vadd.f32 %v575, %v1218
  %v1220 = vpop.f32.mrb[0].mxu0
  %v1221 = vadd.f32 %v577, %v1220
  %v1222 = vpop.f32.mrb[0].mxu0
  %v1223 = vadd.f32 %v579, %v1222
  %1224 = vmatprep.mubr.bf16.mxu0 0
  %1225 = vmatmul.mubr.bf16.gmra.mrb[0].mxu0 %v1097
  %v1226 = vpop.f32.mrb[0].mxu0
  %v1227 = vadd.f32 %v583, %v1226
  %v1228 = vpop.f32.mrb[0].mxu0
  %v1229 = vadd.f32 %v585, %v1228
  %v1230 = vpop.f32.mrb[0].mxu0
  %v1231 = vadd.f32 %v587, %v1230
  %v1232 = vpop.f32.mrb[0].mxu0
  %v1233 = vadd.f32 %v589, %v1232
  %1234 = vmatprep.mubr.bf16.mxu0 0
  %1235 = vmatmul.mubr.bf16.gmra.mrb[0].mxu0 %v1100
  %v1236 = vpop.f32.mrb[0].mxu0
  %v1237 = vadd.f32 %v593, %v1236
  %v1238 = vpop.f32.mrb[0].mxu0
  %v1239 = vadd.f32 %v595, %v1238
  %v1240 = vpop.f32.mrb[0].mxu0
  %v1241 = vadd.f32 %v597, %v1240
  %v1242 = vpop.f32.mrb[0].mxu0
  %v1243 = vadd.f32 %v599, %v1242
  %1244 = vdwg.mxu0
  %1245 = vmatprep.subr.bf16.mxu0 %v1112
  %1246 = vmatpush1.bf16.msra.mxu0 %v1109
  %1247 = vmatprep.subr.bf16.mxu0 0
  %1248 = vmatpush1.bf16.msra.mxu0 0
  %1249 = vmatprep.subr.bf16.mxu0 0
  %1250 = vmatpush1.bf16.msra.mxu0 0
  %1251 = vmatprep.subr.bf16.mxu0 0
  %1252 = vmatpush1.bf16.msra.mxu0 0
  %1253 = vmatprep.subr.bf16.mxu0 0
  %1254 = vmatpush1.bf16.msra.mxu0 0
  %1255 = vmatprep.subr.bf16.mxu0 0
  %1256 = vmatpush1.bf16.msra.mxu0 0
  %1257 = vmatprep.subr.bf16.mxu0 0
  %1258 = vmatpush1.bf16.msra.mxu0 0
  %1259 = vmatprep.subr.bf16.mxu0 0
  %1260 = vmatpush1.bf16.msra.mxu0 0
  %1261 = vmatprep.subr.bf16.mxu0 0
  %1262 = vmatpush1.bf16.msra.mxu0 0
  %1263 = vmatprep.subr.bf16.mxu0 0
  %1264 = vmatpush1.bf16.msra.mxu0 0
  %1265 = vmatprep.subr.bf16.mxu0 0
  %1266 = vmatpush1.bf16.msra.mxu0 0
  %1267 = vmatprep.subr.bf16.mxu0 0
  %1268 = vmatpush1.bf16.msra.mxu0 0
  %1269 = vmatprep.subr.bf16.mxu0 0
  %1270 = vmatpush1.bf16.msra.mxu0 0
  %1271 = vmatprep.subr.bf16.mxu0 0
  %1272 = vmatpush1.bf16.msra.mxu0 0
  %1273 = vmatprep.subr.bf16.mxu0 0
  %1274 = vmatpush1.bf16.msra.mxu0 0
  %1275 = vmatprep.subr.bf16.mxu0 0
  %1276 = vmatpush1.bf16.msra.mxu0 0
  %1277 = vmatprep.mubr.bf16.mxu0 0
  %1278 = vmatmul.mubr.bf16.gmra.mrb[0].mxu0 %v1079
  %v1279 = vpop.f32.mrb[0].mxu0
  %v1280 = vadd.f32 %v636, %v1279
  %v1281 = vpop.f32.mrb[0].mxu0
  %v1282 = vadd.f32 %v638, %v1281
  %v1283 = vpop.f32.mrb[0].mxu0
  %v1284 = vadd.f32 %v640, %v1283
  %v1285 = vpop.f32.mrb[0].mxu0
  %v1286 = vadd.f32 %v642, %v1285
  %1287 = vmatprep.mubr.bf16.mxu0 0
  %1288 = vmatmul.mubr.bf16.gmra.mrb[0].mxu0 %v1082
  %v1289 = vpop.f32.mrb[0].mxu0
  %v1290 = vadd.f32 %v646, %v1289
  %v1291 = vpop.f32.mrb[0].mxu0
  %v1292 = vadd.f32 %v648, %v1291
  %v1293 = vpop.f32.mrb[0].mxu0
  %v1294 = vadd.f32 %v650, %v1293
  %v1295 = vpop.f32.mrb[0].mxu0
  %v1296 = vadd.f32 %v652, %v1295
  %1297 = vmatprep.mubr.bf16.mxu0 0
  %1298 = vmatmul.mubr.bf16.gmra.mrb[0].mxu0 %v1085
  %v1299 = vpop.f32.mrb[0].mxu0
  %v1300 = vadd.f32 %v656, %v1299
  %v1301 = vpop.f32.mrb[0].mxu0
  %v1302 = vadd.f32 %v658, %v1301
  %v1303 = vpop.f32.mrb[0].mxu0
  %v1304 = vadd.f32 %v660, %v1303
  %v1305 = vpop.f32.mrb[0].mxu0
  %v1306 = vadd.f32 %v662, %v1305
  %1307 = vmatprep.mubr.bf16.mxu0 0
  %1308 = vmatmul.mubr.bf16.gmra.mrb[0].mxu0 %v1088
  %v1309 = vpop.f32.mrb[0].mxu0
  %v1310 = vadd.f32 %v666, %v1309
  %v1311 = vpop.f32.mrb[0].mxu0
  %v1312 = vadd.f32 %v668, %v1311
  %v1313 = vpop.f32.mrb[0].mxu0
  %v1314 = vadd.f32 %v670, %v1313
  %v1315 = vpop.f32.mrb[0].mxu0
  %v1316 = vadd.f32 %v672, %v1315
  %1317 = vmatprep.mubr.bf16.mxu0 0
  %1318 = vmatmul.mubr.bf16.gmra.mrb[0].mxu0 %v1091
  %v1319 = vpop.f32.mrb[0].mxu0
  %v1320 = vadd.f32 %v676, %v1319
  %v1321 = vpop.f32.mrb[0].mxu0
  %v1322 = vadd.f32 %v678, %v1321
  %v1323 = vpop.f32.mrb[0].mxu0
  %v1324 = vadd.f32 %v680, %v1323
  %v1325 = vpop.f32.mrb[0].mxu0
  %v1326 = vadd.f32 %v682, %v1325
  %1327 = vmatprep.mubr.bf16.mxu0 0
  %1328 = vmatmul.mubr.bf16.gmra.mrb[0].mxu0 %v1094
  %v1329 = vpop.f32.mrb[0].mxu0
  %v1330 = vadd.f32 %v686, %v1329
  %v1331 = vpop.f32.mrb[0].mxu0
  %v1332 = vadd.f32 %v688, %v1331
  %v1333 = vpop.f32.mrb[0].mxu0
  %v1334 = vadd.f32 %v690, %v1333
  %v1335 = vpop.f32.mrb[0].mxu0
  %v1336 = vadd.f32 %v692, %v1335
  %1337 = vmatprep.mubr.bf16.mxu0 0
  %1338 = vmatmul.mubr.bf16.gmra.mrb[0].mxu0 %v1097
  %v1339 = vpop.f32.mrb[0].mxu0
  %v1340 = vadd.f32 %v696, %v1339
  %v1341 = vpop.f32.mrb[0].mxu0
  %v1342 = vadd.f32 %v698, %v1341
  %v1343 = vpop.f32.mrb[0].mxu0
  %v1344 = vadd.f32 %v700, %v1343
  %v1345 = vpop.f32.mrb[0].mxu0
  %v1346 = vadd.f32 %v702, %v1345
  %1347 = vmatprep.mubr.bf16.mxu0 0
  %1348 = vmatmul.mubr.bf16.gmra.mrb[0].mxu0 %v1100
  %v1349 = vpop.f32.mrb[0].mxu0
  %v1350 = vadd.f32 %v706, %v1349
  %v1351 = vpop.f32.mrb[0].mxu0
  %v1352 = vadd.f32 %v708, %v1351
  %v1353 = vpop.f32.mrb[0].mxu0
  %v1354 = vadd.f32 %v710, %v1353
  %v1355 = vpop.f32.mrb[0].mxu0
  %v1356 = vadd.f32 %v712, %v1355
  %1357 = vdwg.mxu0
  %1358 = vmatprep.subr.bf16.mxu0 %v1118
  %1359 = vmatpush1.bf16.msra.mxu0 %v1115
  %1360 = vmatprep.subr.bf16.mxu0 0
  %1361 = vmatpush1.bf16.msra.mxu0 0
  %1362 = vmatprep.subr.bf16.mxu0 0
  %1363 = vmatpush1.bf16.msra.mxu0 0
  %1364 = vmatprep.subr.bf16.mxu0 0
  %1365 = vmatpush1.bf16.msra.mxu0 0
  %1366 = vmatprep.subr.bf16.mxu0 0
  %1367 = vmatpush1.bf16.msra.mxu0 0
  %1368 = vmatprep.subr.bf16.mxu0 0
  %1369 = vmatpush1.bf16.msra.mxu0 0
  %1370 = vmatprep.subr.bf16.mxu0 0
  %1371 = vmatpush1.bf16.msra.mxu0 0
  %1372 = vmatprep.subr.bf16.mxu0 0
  %1373 = vmatpush1.bf16.msra.mxu0 0
  %1374 = vmatprep.subr.bf16.mxu0 0
  %1375 = vmatpush1.bf16.msra.mxu0 0
  %1376 = vmatprep.subr.bf16.mxu0 0
  %1377 = vmatpush1.bf16.msra.mxu0 0
  %1378 = vmatprep.subr.bf16.mxu0 0
  %1379 = vmatpush1.bf16.msra.mxu0 0
  %1380 = vmatprep.subr.bf16.mxu0 0
  %1381 = vmatpush1.bf16.msra.mxu0 0
  %1382 = vmatprep.subr.bf16.mxu0 0
  %1383 = vmatpush1.bf16.msra.mxu0 0
  %1384 = vmatprep.subr.bf16.mxu0 0
  %1385 = vmatpush1.bf16.msra.mxu0 0
  %1386 = vmatprep.subr.bf16.mxu0 0
  %1387 = vmatpush1.bf16.msra.mxu0 0
  %1388 = vmatprep.subr.bf16.mxu0 0
  %1389 = vmatpush1.bf16.msra.mxu0 0
  %1390 = vmatprep.mubr.bf16.mxu0 0
  %1391 = vmatmul.mubr.bf16.gmra.mrb[0].mxu0 %v1079
  %v1392 = vpop.f32.mrb[0].mxu0
  %v1393 = vadd.f32 %v749, %v1392
  %v1394 = vpop.f32.mrb[0].mxu0
  %v1395 = vadd.f32 %v751, %v1394
  %v1396 = vpop.f32.mrb[0].mxu0
  %v1397 = vadd.f32 %v753, %v1396
  %v1398 = vpop.f32.mrb[0].mxu0
  %v1399 = vadd.f32 %v755, %v1398
  %1400 = vmatprep.mubr.bf16.mxu0 0
  %1401 = vmatmul.mubr.bf16.gmra.mrb[0].mxu0 %v1082
  %v1402 = vpop.f32.mrb[0].mxu0
  %v1403 = vadd.f32 %v759, %v1402
  %v1404 = vpop.f32.mrb[0].mxu0
  %v1405 = vadd.f32 %v761, %v1404
  %v1406 = vpop.f32.mrb[0].mxu0
  %v1407 = vadd.f32 %v763, %v1406
  %v1408 = vpop.f32.mrb[0].mxu0
  %v1409 = vadd.f32 %v765, %v1408
  %1410 = vmatprep.mubr.bf16.mxu0 0
  %1411 = vmatmul.mubr.bf16.gmra.mrb[0].mxu0 %v1085
  %v1412 = vpop.f32.mrb[0].mxu0
  %v1413 = vadd.f32 %v769, %v1412
  %v1414 = vpop.f32.mrb[0].mxu0
  %v1415 = vadd.f32 %v771, %v1414
  %v1416 = vpop.f32.mrb[0].mxu0
  %v1417 = vadd.f32 %v773, %v1416
  %v1418 = vpop.f32.mrb[0].mxu0
  %v1419 = vadd.f32 %v775, %v1418
  %1420 = vmatprep.mubr.bf16.mxu0 0
  %1421 = vmatmul.mubr.bf16.gmra.mrb[0].mxu0 %v1088
  %v1422 = vpop.f32.mrb[0].mxu0
  %v1423 = vadd.f32 %v779, %v1422
  %v1424 = vpop.f32.mrb[0].mxu0
  %v1425 = vadd.f32 %v781, %v1424
  %v1426 = vpop.f32.mrb[0].mxu0
  %v1427 = vadd.f32 %v783, %v1426
  %v1428 = vpop.f32.mrb[0].mxu0
  %v1429 = vadd.f32 %v785, %v1428
  %1430 = vmatprep.mubr.bf16.mxu0 0
  %1431 = vmatmul.mubr.bf16.gmra.mrb[0].mxu0 %v1091
  %v1432 = vpop.f32.mrb[0].mxu0
  %v1433 = vadd.f32 %v789, %v1432
  %v1434 = vpop.f32.mrb[0].mxu0
  %v1435 = vadd.f32 %v791, %v1434
  %v1436 = vpop.f32.mrb[0].mxu0
  %v1437 = vadd.f32 %v793, %v1436
  %v1438 = vpop.f32.mrb[0].mxu0
  %v1439 = vadd.f32 %v795, %v1438
  %1440 = vmatprep.mubr.bf16.mxu0 0
  %1441 = vmatmul.mubr.bf16.gmra.mrb[0].mxu0 %v1094
  %v1442 = vpop.f32.mrb[0].mxu0
  %v1443 = vadd.f32 %v799, %v1442
  %v1444 = vpop.f32.mrb[0].mxu0
  %v1445 = vadd.f32 %v801, %v1444
  %v1446 = vpop.f32.mrb[0].mxu0
  %v1447 = vadd.f32 %v803, %v1446
  %v1448 = vpop.f32.mrb[0].mxu0
  %v1449 = vadd.f32 %v805, %v1448
  %1450 = vmatprep.mubr.bf16.mxu0 0
  %1451 = vmatmul.mubr.bf16.gmra.mrb[0].mxu0 %v1097
  %v1452 = vpop.f32.mrb[0].mxu0
  %v1453 = vadd.f32 %v809, %v1452
  %v1454 = vpop.f32.mrb[0].mxu0
  %v1455 = vadd.f32 %v811, %v1454
  %v1456 = vpop.f32.mrb[0].mxu0
  %v1457 = vadd.f32 %v813, %v1456
  %v1458 = vpop.f32.mrb[0].mxu0
  %v1459 = vadd.f32 %v815, %v1458
  %1460 = vmatprep.mubr.bf16.mxu0 0
  %1461 = vmatmul.mubr.bf16.gmra.mrb[0].mxu0 %v1100
  %v1462 = vpop.f32.mrb[0].mxu0
  %v1463 = vadd.f32 %v819, %v1462
  %v1464 = vpop.f32.mrb[0].mxu0
  %v1465 = vadd.f32 %v821, %v1464
  %v1466 = vpop.f32.mrb[0].mxu0
  %v1467 = vadd.f32 %v823, %v1466
  %v1468 = vpop.f32.mrb[0].mxu0
  %v1469 = vadd.f32 %v825, %v1468
  %1470 = vdwg.mxu0
  %1471 = vmatprep.subr.bf16.mxu0 %v1124
  %1472 = vmatpush1.bf16.msra.mxu0 %v1121
  %1473 = vmatprep.subr.bf16.mxu0 0
  %1474 = vmatpush1.bf16.msra.mxu0 0
  %1475 = vmatprep.subr.bf16.mxu0 0
  %1476 = vmatpush1.bf16.msra.mxu0 0
  %1477 = vmatprep.subr.bf16.mxu0 0
  %1478 = vmatpush1.bf16.msra.mxu0 0
  %1479 = vmatprep.subr.bf16.mxu0 0
  %1480 = vmatpush1.bf16.msra.mxu0 0
  %1481 = vmatprep.subr.bf16.mxu0 0
  %1482 = vmatpush1.bf16.msra.mxu0 0
  %1483 = vmatprep.subr.bf16.mxu0 0
  %1484 = vmatpush1.bf16.msra.mxu0 0
  %1485 = vmatprep.subr.bf16.mxu0 0
  %1486 = vmatpush1.bf16.msra.mxu0 0
  %1487 = vmatprep.subr.bf16.mxu0 0
  %1488 = vmatpush1.bf16.msra.mxu0 0
  %1489 = vmatprep.subr.bf16.mxu0 0
  %1490 = vmatpush1.bf16.msra.mxu0 0
  %1491 = vmatprep.subr.bf16.mxu0 0
  %1492 = vmatpush1.bf16.msra.mxu0 0
  %1493 = vmatprep.subr.bf16.mxu0 0
  %1494 = vmatpush1.bf16.msra.mxu0 0
  %1495 = vmatprep.subr.bf16.mxu0 0
  %1496 = vmatpush1.bf16.msra.mxu0 0
  %1497 = vmatprep.subr.bf16.mxu0 0
  %1498 = vmatpush1.bf16.msra.mxu0 0
  %1499 = vmatprep.subr.bf16.mxu0 0
  %1500 = vmatpush1.bf16.msra.mxu0 0
  %1501 = vmatprep.subr.bf16.mxu0 0
  %1502 = vmatpush1.bf16.msra.mxu0 0
  %1503 = vmatprep.mubr.bf16.mxu0 0
  %1504 = vmatmul.mubr.bf16.gmra.mrb[0].mxu0 %v1079
  %v1505 = vpop.f32.mrb[0].mxu0
  %v1506 = vadd.f32 %v862, %v1505
  %v1507 = vpop.f32.mrb[0].mxu0
  %v1508 = vadd.f32 %v864, %v1507
  %v1509 = vpop.f32.mrb[0].mxu0
  %v1510 = vadd.f32 %v866, %v1509
  %v1511 = vpop.f32.mrb[0].mxu0
  %v1512 = vadd.f32 %v868, %v1511
  %1513 = vmatprep.mubr.bf16.mxu0 0
  %1514 = vmatmul.mubr.bf16.gmra.mrb[0].mxu0 %v1082
  %v1515 = vpop.f32.mrb[0].mxu0
  %v1516 = vadd.f32 %v872, %v1515
  %v1517 = vpop.f32.mrb[0].mxu0
  %v1518 = vadd.f32 %v874, %v1517
  %v1519 = vpop.f32.mrb[0].mxu0
  %v1520 = vadd.f32 %v876, %v1519
  %v1521 = vpop.f32.mrb[0].mxu0
  %v1522 = vadd.f32 %v878, %v1521
  %1523 = vmatprep.mubr.bf16.mxu0 0
  %1524 = vmatmul.mubr.bf16.gmra.mrb[0].mxu0 %v1085
  %v1525 = vpop.f32.mrb[0].mxu0
  %v1526 = vadd.f32 %v882, %v1525
  %v1527 = vpop.f32.mrb[0].mxu0
  %v1528 = vadd.f32 %v884, %v1527
  %v1529 = vpop.f32.mrb[0].mxu0
  %v1530 = vadd.f32 %v886, %v1529
  %v1531 = vpop.f32.mrb[0].mxu0
  %v1532 = vadd.f32 %v888, %v1531
  %1533 = vmatprep.mubr.bf16.mxu0 0
  %1534 = vmatmul.mubr.bf16.gmra.mrb[0].mxu0 %v1088
  %v1535 = vpop.f32.mrb[0].mxu0
  %v1536 = vadd.f32 %v892, %v1535
  %v1537 = vpop.f32.mrb[0].mxu0
  %v1538 = vadd.f32 %v894, %v1537
  %v1539 = vpop.f32.mrb[0].mxu0
  %v1540 = vadd.f32 %v896, %v1539
  %v1541 = vpop.f32.mrb[0].mxu0
  %v1542 = vadd.f32 %v898, %v1541
  %1543 = vmatprep.mubr.bf16.mxu0 0
  %1544 = vmatmul.mubr.bf16.gmra.mrb[0].mxu0 %v1091
  %v1545 = vpop.f32.mrb[0].mxu0
  %v1546 = vadd.f32 %v902, %v1545
  %v1547 = vpop.f32.mrb[0].mxu0
  %v1548 = vadd.f32 %v904, %v1547
  %v1549 = vpop.f32.mrb[0].mxu0
  %v1550 = vadd.f32 %v906, %v1549
  %v1551 = vpop.f32.mrb[0].mxu0
  %v1552 = vadd.f32 %v908, %v1551
  %1553 = vmatprep.mubr.bf16.mxu0 0
  %1554 = vmatmul.mubr.bf16.gmra.mrb[0].mxu0 %v1094
  %v1555 = vpop.f32.mrb[0].mxu0
  %v1556 = vadd.f32 %v912, %v1555
  %v1557 = vpop.f32.mrb[0].mxu0
  %v1558 = vadd.f32 %v914, %v1557
  %v1559 = vpop.f32.mrb[0].mxu0
  %v1560 = vadd.f32 %v916, %v1559
  %v1561 = vpop.f32.mrb[0].mxu0
  %v1562 = vadd.f32 %v918, %v1561
  %1563 = vmatprep.mubr.bf16.mxu0 0
  %1564 = vmatmul.mubr.bf16.gmra.mrb[0].mxu0 %v1097
  %v1565 = vpop.f32.mrb[0].mxu0
  %v1566 = vadd.f32 %v922, %v1565
  %v1567 = vpop.f32.mrb[0].mxu0
  %v1568 = vadd.f32 %v924, %v1567
  %v1569 = vpop.f32.mrb[0].mxu0
  %v1570 = vadd.f32 %v926, %v1569
  %v1571 = vpop.f32.mrb[0].mxu0
  %v1572 = vadd.f32 %v928, %v1571
  %1573 = vmatprep.mubr.bf16.mxu0 0
  %1574 = vmatmul.mubr.bf16.gmra.mrb[0].mxu0 %v1100
  %v1575 = vpop.f32.mrb[0].mxu0
  %v1576 = vadd.f32 %v932, %v1575
  %v1577 = vpop.f32.mrb[0].mxu0
  %v1578 = vadd.f32 %v934, %v1577
  %v1579 = vpop.f32.mrb[0].mxu0
  %v1580 = vadd.f32 %v936, %v1579
  %v1581 = vpop.f32.mrb[0].mxu0
  %v1582 = vadd.f32 %v938, %v1581
  %1583 = vdwg.mxu0
  %1584 = vmatprep.subr.bf16.mxu0 %v1130
  %1585 = vmatpush1.bf16.msra.mxu0 %v1127
  %1586 = vmatprep.subr.bf16.mxu0 0
  %1587 = vmatpush1.bf16.msra.mxu0 0
  %1588 = vmatprep.subr.bf16.mxu0 0
  %1589 = vmatpush1.bf16.msra.mxu0 0
  %1590 = vmatprep.subr.bf16.mxu0 0
  %1591 = vmatpush1.bf16.msra.mxu0 0
  %1592 = vmatprep.subr.bf16.mxu0 0
  %1593 = vmatpush1.bf16.msra.mxu0 0
  %1594 = vmatprep.subr.bf16.mxu0 0
  %1595 = vmatpush1.bf16.msra.mxu0 0
  %1596 = vmatprep.subr.bf16.mxu0 0
  %1597 = vmatpush1.bf16.msra.mxu0 0
  %1598 = vmatprep.subr.bf16.mxu0 0
  %1599 = vmatpush1.bf16.msra.mxu0 0
  %1600 = vmatprep.subr.bf16.mxu0 0
  %1601 = vmatpush1.bf16.msra.mxu0 0
  %1602 = vmatprep.subr.bf16.mxu0 0
  %1603 = vmatpush1.bf16.msra.mxu0 0
  %1604 = vmatprep.subr.bf16.mxu0 0
  %1605 = vmatpush1.bf16.msra.mxu0 0
  %1606 = vmatprep.subr.bf16.mxu0 0
  %1607 = vmatpush1.bf16.msra.mxu0 0
  %1608 = vmatprep.subr.bf16.mxu0 0
  %1609 = vmatpush1.bf16.msra.mxu0 0
  %1610 = vmatprep.subr.bf16.mxu0 0
  %1611 = vmatpush1.bf16.msra.mxu0 0
  %1612 = vmatprep.subr.bf16.mxu0 0
  %1613 = vmatpush1.bf16.msra.mxu0 0
  %1614 = vmatprep.subr.bf16.mxu0 0
  %1615 = vmatpush1.bf16.msra.mxu0 0
  %1616 = vmatprep.mubr.bf16.mxu0 0
  %1617 = vmatmul.mubr.bf16.gmra.mrb[0].mxu0 %v1079
  %v1618 = vpop.f32.mrb[0].mxu0
  %v1619 = vadd.f32 %v975, %v1618
  %v1620 = vpop.f32.mrb[0].mxu0
  %v1621 = vadd.f32 %v977, %v1620
  %v1622 = vpop.f32.mrb[0].mxu0
  %v1623 = vadd.f32 %v979, %v1622
  %v1624 = vpop.f32.mrb[0].mxu0
  %v1625 = vadd.f32 %v981, %v1624
  %1626 = vmatprep.mubr.bf16.mxu0 0
  %1627 = vmatmul.mubr.bf16.gmra.mrb[0].mxu0 %v1082
  %v1628 = vpop.f32.mrb[0].mxu0
  %v1629 = vadd.f32 %v985, %v1628
  %v1630 = vpop.f32.mrb[0].mxu0
  %v1631 = vadd.f32 %v987, %v1630
  %v1632 = vpop.f32.mrb[0].mxu0
  %v1633 = vadd.f32 %v989, %v1632
  %v1634 = vpop.f32.mrb[0].mxu0
  %v1635 = vadd.f32 %v991, %v1634
  %1636 = vmatprep.mubr.bf16.mxu0 0
  %1637 = vmatmul.mubr.bf16.gmra.mrb[0].mxu0 %v1085
  %v1638 = vpop.f32.mrb[0].mxu0
  %v1639 = vadd.f32 %v995, %v1638
  %v1640 = vpop.f32.mrb[0].mxu0
  %v1641 = vadd.f32 %v997, %v1640
  %v1642 = vpop.f32.mrb[0].mxu0
  %v1643 = vadd.f32 %v999, %v1642
  %v1644 = vpop.f32.mrb[0].mxu0
  %v1645 = vadd.f32 %v1001, %v1644
  %1646 = vmatprep.mubr.bf16.mxu0 0
  %1647 = vmatmul.mubr.bf16.gmra.mrb[0].mxu0 %v1088
  %v1648 = vpop.f32.mrb[0].mxu0
  %v1649 = vadd.f32 %v1005, %v1648
  %v1650 = vpop.f32.mrb[0].mxu0
  %v1651 = vadd.f32 %v1007, %v1650
  %v1652 = vpop.f32.mrb[0].mxu0
  %v1653 = vadd.f32 %v1009, %v1652
  %v1654 = vpop.f32.mrb[0].mxu0
  %v1655 = vadd.f32 %v1011, %v1654
  %1656 = vmatprep.mubr.bf16.mxu0 0
  %1657 = vmatmul.mubr.bf16.gmra.mrb[0].mxu0 %v1091
  %v1658 = vpop.f32.mrb[0].mxu0
  %v1659 = vadd.f32 %v1015, %v1658
  %v1660 = vpop.f32.mrb[0].mxu0
  %v1661 = vadd.f32 %v1017, %v1660
  %v1662 = vpop.f32.mrb[0].mxu0
  %v1663 = vadd.f32 %v1019, %v1662
  %v1664 = vpop.f32.mrb[0].mxu0
  %v1665 = vadd.f32 %v1021, %v1664
  %1666 = vmatprep.mubr.bf16.mxu0 0
  %1667 = vmatmul.mubr.bf16.gmra.mrb[0].mxu0 %v1094
  %v1668 = vpop.f32.mrb[0].mxu0
  %v1669 = vadd.f32 %v1025, %v1668
  %v1670 = vpop.f32.mrb[0].mxu0
  %v1671 = vadd.f32 %v1027, %v1670
  %v1672 = vpop.f32.mrb[0].mxu0
  %v1673 = vadd.f32 %v1029, %v1672
  %v1674 = vpop.f32.mrb[0].mxu0
  %v1675 = vadd.f32 %v1031, %v1674
  %1676 = vmatprep.mubr.bf16.mxu0 0
  %1677 = vmatmul.mubr.bf16.gmra.mrb[0].mxu0 %v1097
  %v1678 = vpop.f32.mrb[0].mxu0
  %v1679 = vadd.f32 %v1035, %v1678
  %v1680 = vpop.f32.mrb[0].mxu0
  %v1681 = vadd.f32 %v1037, %v1680
  %v1682 = vpop.f32.mrb[0].mxu0
  %v1683 = vadd.f32 %v1039, %v1682
  %v1684 = vpop.f32.mrb[0].mxu0
  %v1685 = vadd.f32 %v1041, %v1684
  %1686 = vmatprep.mubr.bf16.mxu0 0
  %1687 = vmatmul.mubr.bf16.gmra.mrb[0].mxu0 %v1100
  %v1688 = vpop.f32.mrb[0].mxu0
  %v1689 = vadd.f32 %v1045, %v1688
  %v1690 = vpop.f32.mrb[0].mxu0
  %v1691 = vadd.f32 %v1047, %v1690
  %v1692 = vpop.f32.mrb[0].mxu0
  %v1693 = vadd.f32 %v1049, %v1692
  %v1694 = vpop.f32.mrb[0].mxu0
  %v1695 = vadd.f32 %v1051, %v1694
  %1696 = vdwg.mxu0
  %v1697 = vpack.c.bf16 %v381, %v380
  %v1698 = vpack.c.bf16 %v383, %v382
  %v1699 = vpack.c.bf16 %v385, %v384
  %v1700 = vpack.c.bf16 %v387, %v386
  %v1701 = vpack.c.bf16 %v389, %v388
  %v1702 = vpack.c.bf16 %v391, %v390
  %v1703 = vpack.c.bf16 %v393, %v392
  %v1704 = vpack.c.bf16 %v395, %v394
  %s1705 = scalar_lea.vmem %s2, 80
  %v1706 = vld [vmem:[%s1705] sm:$0xff]
  %v1707 = vld [vmem:[%s1705 + $0x8] sm:$0xff]
  %v1708 = vld [vmem:[%s1705 + $0x10] sm:$0xff]
  %v1709 = vld [vmem:[%s1705 + $0x18] sm:$0xff]
  %v1710 = vld [vmem:[%s1705 + $0x20] sm:$0xff]
  %v1716 = vunpack.c.l.b16 %v1706
  %v1717 = vunpack.c.h.b16 %v1706
  %v1718 = vunpack.c.l.b16 %v1707
  %v1719 = vunpack.c.h.b16 %v1707
  %v1720 = vunpack.c.l.b16 %v1708
  %v1721 = vunpack.c.h.b16 %v1708
  %v1722 = vunpack.c.l.b16 %v1709
  %v1723 = vunpack.c.h.b16 %v1709
  %v1724 = vunpack.c.l.b16 %v1710
  %v1725 = vunpack.c.h.b16 %v1710
  %v1726 = vpack.c.b16 %v1716, %v1716
  %v1727 = vpack.c.b16 %v1717, %v1717
  %v1728 = vpack.c.b16 %v1718, %v1718
  %v1729 = vpack.c.b16 %v1719, %v1719
  %v1730 = vpack.c.b16 %v1720, %v1720
  %v1731 = vpack.c.b16 %v1721, %v1721
  %v1732 = vpack.c.b16 %v1722, %v1722
  %v1733 = vpack.c.b16 %v1723, %v1723
  %v1734 = vpack.c.b16 %v1724, %v1724
  %v1735 = vpack.c.b16 %v1725, %v1725
  %v1737 = vsel %vm432, %v1697, 0
  %v1740 = vsel %vm432, %v1698, 0
  %v1743 = vsel %vm432, %v1699, 0
  %v1746 = vsel %vm432, %v1700, 0
  %v1749 = vsel %vm432, %v1701, 0
  %v1752 = vsel %vm432, %v1702, 0
  %v1755 = vsel %vm432, %v1703, 0
  %v1758 = vsel %vm432, %v1704, 0
  %v1761 = vsel %vm457, %v1726, 0
  %v1764 = vsel %vm457, %v1727, 0
  %v1767 = vsel %vm457, %v1728, 0
  %v1770 = vsel %vm457, %v1729, 0
  %v1773 = vsel %vm457, %v1730, 0
  %v1776 = vsel %vm457, %v1731, 0
  %v1779 = vsel %vm457, %v1732, 0
  %v1782 = vsel %vm457, %v1733, 0
  %v1785 = vsel %vm457, %v1734, 0
  %v1788 = vsel %vm457, %v1735, 0
  %1790 = vmatprep.subr.bf16.mxu0 %v1764
  %1791 = vmatpush1.bf16.msra.mxu0 %v1761
  %1792 = vmatprep.subr.bf16.mxu0 0
  %1793 = vmatpush1.bf16.msra.mxu0 0
  %1794 = vmatprep.subr.bf16.mxu0 0
  %1795 = vmatpush1.bf16.msra.mxu0 0
  %1796 = vmatprep.subr.bf16.mxu0 0
  %1797 = vmatpush1.bf16.msra.mxu0 0
  %1798 = vmatprep.subr.bf16.mxu0 0
  %1799 = vmatpush1.bf16.msra.mxu0 0
  %1800 = vmatprep.subr.bf16.mxu0 0
  %1801 = vmatpush1.bf16.msra.mxu0 0
  %1802 = vmatprep.subr.bf16.mxu0 0
  %1803 = vmatpush1.bf16.msra.mxu0 0
  %1804 = vmatprep.subr.bf16.mxu0 0
  %1805 = vmatpush1.bf16.msra.mxu0 0
  %1806 = vmatprep.subr.bf16.mxu0 0
  %1807 = vmatpush1.bf16.msra.mxu0 0
  %1808 = vmatprep.subr.bf16.mxu0 0
  %1809 = vmatpush1.bf16.msra.mxu0 0
  %1810 = vmatprep.subr.bf16.mxu0 0
  %1811 = vmatpush1.bf16.msra.mxu0 0
  %1812 = vmatprep.subr.bf16.mxu0 0
  %1813 = vmatpush1.bf16.msra.mxu0 0
  %1814 = vmatprep.subr.bf16.mxu0 0
  %1815 = vmatpush1.bf16.msra.mxu0 0
  %1816 = vmatprep.subr.bf16.mxu0 0
  %1817 = vmatpush1.bf16.msra.mxu0 0
  %1818 = vmatprep.subr.bf16.mxu0 0
  %1819 = vmatpush1.bf16.msra.mxu0 0
  %1820 = vmatprep.subr.bf16.mxu0 0
  %1821 = vmatpush1.bf16.msra.mxu0 0
  %1822 = vmatprep.mubr.bf16.mxu0 0
  %1823 = vmatmul.mubr.bf16.gmra.mrb[0].mxu0 %v1737
  %v1824 = vpop.f32.mrb[0].mxu0
  %v1825 = vadd.f32 0.0, %v1824
  %v1826 = vpop.f32.mrb[0].mxu0
  %v1827 = vadd.f32 0.0, %v1826
  %v1828 = vpop.f32.mrb[0].mxu0
  %v1829 = vadd.f32 0.0, %v1828
  %v1830 = vpop.f32.mrb[0].mxu0
  %v1831 = vadd.f32 0.0, %v1830
  %1832 = vmatprep.mubr.bf16.mxu0 0
  %1833 = vmatmul.mubr.bf16.gmra.mrb[0].mxu0 %v1740
  %v1834 = vpop.f32.mrb[0].mxu0
  %v1835 = vadd.f32 0.0, %v1834
  %v1836 = vpop.f32.mrb[0].mxu0
  %v1837 = vadd.f32 0.0, %v1836
  %v1838 = vpop.f32.mrb[0].mxu0
  %v1839 = vadd.f32 0.0, %v1838
  %v1840 = vpop.f32.mrb[0].mxu0
  %v1841 = vadd.f32 0.0, %v1840
  %1842 = vmatprep.mubr.bf16.mxu0 0
  %1843 = vmatmul.mubr.bf16.gmra.mrb[0].mxu0 %v1743
  %v1844 = vpop.f32.mrb[0].mxu0
  %v1845 = vadd.f32 0.0, %v1844
  %v1846 = vpop.f32.mrb[0].mxu0
  %v1847 = vadd.f32 0.0, %v1846
  %v1848 = vpop.f32.mrb[0].mxu0
  %v1849 = vadd.f32 0.0, %v1848
  %v1850 = vpop.f32.mrb[0].mxu0
  %v1851 = vadd.f32 0.0, %v1850
  %1852 = vmatprep.mubr.bf16.mxu0 0
  %1853 = vmatmul.mubr.bf16.gmra.mrb[0].mxu0 %v1746
  %v1854 = vpop.f32.mrb[0].mxu0
  %v1855 = vadd.f32 0.0, %v1854
  %v1856 = vpop.f32.mrb[0].mxu0
  %v1857 = vadd.f32 0.0, %v1856
  %v1858 = vpop.f32.mrb[0].mxu0
  %v1859 = vadd.f32 0.0, %v1858
  %v1860 = vpop.f32.mrb[0].mxu0
  %v1861 = vadd.f32 0.0, %v1860
  %1862 = vmatprep.mubr.bf16.mxu0 0
  %1863 = vmatmul.mubr.bf16.gmra.mrb[0].mxu0 %v1749
  %v1864 = vpop.f32.mrb[0].mxu0
  %v1865 = vadd.f32 0.0, %v1864
  %v1866 = vpop.f32.mrb[0].mxu0
  %v1867 = vadd.f32 0.0, %v1866
  %v1868 = vpop.f32.mrb[0].mxu0
  %v1869 = vadd.f32 0.0, %v1868
  %v1870 = vpop.f32.mrb[0].mxu0
  %v1871 = vadd.f32 0.0, %v1870
  %1872 = vmatprep.mubr.bf16.mxu0 0
  %1873 = vmatmul.mubr.bf16.gmra.mrb[0].mxu0 %v1752
  %v1874 = vpop.f32.mrb[0].mxu0
  %v1875 = vadd.f32 0.0, %v1874
  %v1876 = vpop.f32.mrb[0].mxu0
  %v1877 = vadd.f32 0.0, %v1876
  %v1878 = vpop.f32.mrb[0].mxu0
  %v1879 = vadd.f32 0.0, %v1878
  %v1880 = vpop.f32.mrb[0].mxu0
  %v1881 = vadd.f32 0.0, %v1880
  %1882 = vmatprep.mubr.bf16.mxu0 0
  %1883 = vmatmul.mubr.bf16.gmra.mrb[0].mxu0 %v1755
  %v1884 = vpop.f32.mrb[0].mxu0
  %v1885 = vadd.f32 0.0, %v1884
  %v1886 = vpop.f32.mrb[0].mxu0
  %v1887 = vadd.f32 0.0, %v1886
  %v1888 = vpop.f32.mrb[0].mxu0
  %v1889 = vadd.f32 0.0, %v1888
  %v1890 = vpop.f32.mrb[0].mxu0
  %v1891 = vadd.f32 0.0, %v1890
  %1892 = vmatprep.mubr.bf16.mxu0 0
  %1893 = vmatmul.mubr.bf16.gmra.mrb[0].mxu0 %v1758
  %v1894 = vpop.f32.mrb[0].mxu0
  %v1895 = vadd.f32 0.0, %v1894
  %v1896 = vpop.f32.mrb[0].mxu0
  %v1897 = vadd.f32 0.0, %v1896
  %v1898 = vpop.f32.mrb[0].mxu0
  %v1899 = vadd.f32 0.0, %v1898
  %v1900 = vpop.f32.mrb[0].mxu0
  %v1901 = vadd.f32 0.0, %v1900
  %1902 = vdwg.mxu0
  %1903 = vmatprep.subr.bf16.mxu0 %v1770
  %1904 = vmatpush1.bf16.msra.mxu0 %v1767
  %1905 = vmatprep.subr.bf16.mxu0 0
  %1906 = vmatpush1.bf16.msra.mxu0 0
  %1907 = vmatprep.subr.bf16.mxu0 0
  %1908 = vmatpush1.bf16.msra.mxu0 0
  %1909 = vmatprep.subr.bf16.mxu0 0
  %1910 = vmatpush1.bf16.msra.mxu0 0
  %1911 = vmatprep.subr.bf16.mxu0 0
  %1912 = vmatpush1.bf16.msra.mxu0 0
  %1913 = vmatprep.subr.bf16.mxu0 0
  %1914 = vmatpush1.bf16.msra.mxu0 0
  %1915 = vmatprep.subr.bf16.mxu0 0
  %1916 = vmatpush1.bf16.msra.mxu0 0
  %1917 = vmatprep.subr.bf16.mxu0 0
  %1918 = vmatpush1.bf16.msra.mxu0 0
  %1919 = vmatprep.subr.bf16.mxu0 0
  %1920 = vmatpush1.bf16.msra.mxu0 0
  %1921 = vmatprep.subr.bf16.mxu0 0
  %1922 = vmatpush1.bf16.msra.mxu0 0
  %1923 = vmatprep.subr.bf16.mxu0 0
  %1924 = vmatpush1.bf16.msra.mxu0 0
  %1925 = vmatprep.subr.bf16.mxu0 0
  %1926 = vmatpush1.bf16.msra.mxu0 0
  %1927 = vmatprep.subr.bf16.mxu0 0
  %1928 = vmatpush1.bf16.msra.mxu0 0
  %1929 = vmatprep.subr.bf16.mxu0 0
  %1930 = vmatpush1.bf16.msra.mxu0 0
  %1931 = vmatprep.subr.bf16.mxu0 0
  %1932 = vmatpush1.bf16.msra.mxu0 0
  %1933 = vmatprep.subr.bf16.mxu0 0
  %1934 = vmatpush1.bf16.msra.mxu0 0
  %1935 = vmatprep.mubr.bf16.mxu0 0
  %1936 = vmatmul.mubr.bf16.gmra.mrb[0].mxu0 %v1737
  %v1937 = vpop.f32.mrb[0].mxu0
  %v1938 = vadd.f32 0.0, %v1937
  %v1939 = vpop.f32.mrb[0].mxu0
  %v1940 = vadd.f32 0.0, %v1939
  %v1941 = vpop.f32.mrb[0].mxu0
  %v1942 = vadd.f32 0.0, %v1941
  %v1943 = vpop.f32.mrb[0].mxu0
  %v1944 = vadd.f32 0.0, %v1943
  %1945 = vmatprep.mubr.bf16.mxu0 0
  %1946 = vmatmul.mubr.bf16.gmra.mrb[0].mxu0 %v1740
  %v1947 = vpop.f32.mrb[0].mxu0
  %v1948 = vadd.f32 0.0, %v1947
  %v1949 = vpop.f32.mrb[0].mxu0
  %v1950 = vadd.f32 0.0, %v1949
  %v1951 = vpop.f32.mrb[0].mxu0
  %v1952 = vadd.f32 0.0, %v1951
  %v1953 = vpop.f32.mrb[0].mxu0
  %v1954 = vadd.f32 0.0, %v1953
  %1955 = vmatprep.mubr.bf16.mxu0 0
  %1956 = vmatmul.mubr.bf16.gmra.mrb[0].mxu0 %v1743
  %v1957 = vpop.f32.mrb[0].mxu0
  %v1958 = vadd.f32 0.0, %v1957
  %v1959 = vpop.f32.mrb[0].mxu0
  %v1960 = vadd.f32 0.0, %v1959
  %v1961 = vpop.f32.mrb[0].mxu0
  %v1962 = vadd.f32 0.0, %v1961
  %v1963 = vpop.f32.mrb[0].mxu0
  %v1964 = vadd.f32 0.0, %v1963
  %1965 = vmatprep.mubr.bf16.mxu0 0
  %1966 = vmatmul.mubr.bf16.gmra.mrb[0].mxu0 %v1746
  %v1967 = vpop.f32.mrb[0].mxu0
  %v1968 = vadd.f32 0.0, %v1967
  %v1969 = vpop.f32.mrb[0].mxu0
  %v1970 = vadd.f32 0.0, %v1969
  %v1971 = vpop.f32.mrb[0].mxu0
  %v1972 = vadd.f32 0.0, %v1971
  %v1973 = vpop.f32.mrb[0].mxu0
  %v1974 = vadd.f32 0.0, %v1973
  %1975 = vmatprep.mubr.bf16.mxu0 0
  %1976 = vmatmul.mubr.bf16.gmra.mrb[0].mxu0 %v1749
  %v1977 = vpop.f32.mrb[0].mxu0
  %v1978 = vadd.f32 0.0, %v1977
  %v1979 = vpop.f32.mrb[0].mxu0
  %v1980 = vadd.f32 0.0, %v1979
  %v1981 = vpop.f32.mrb[0].mxu0
  %v1982 = vadd.f32 0.0, %v1981
  %v1983 = vpop.f32.mrb[0].mxu0
  %v1984 = vadd.f32 0.0, %v1983
  %1985 = vmatprep.mubr.bf16.mxu0 0
  %1986 = vmatmul.mubr.bf16.gmra.mrb[0].mxu0 %v1752
  %v1987 = vpop.f32.mrb[0].mxu0
  %v1988 = vadd.f32 0.0, %v1987
  %v1989 = vpop.f32.mrb[0].mxu0
  %v1990 = vadd.f32 0.0, %v1989
  %v1991 = vpop.f32.mrb[0].mxu0
  %v1992 = vadd.f32 0.0, %v1991
  %v1993 = vpop.f32.mrb[0].mxu0
  %v1994 = vadd.f32 0.0, %v1993
  %1995 = vmatprep.mubr.bf16.mxu0 0
  %1996 = vmatmul.mubr.bf16.gmra.mrb[0].mxu0 %v1755
  %v1997 = vpop.f32.mrb[0].mxu0
  %v1998 = vadd.f32 0.0, %v1997
  %v1999 = vpop.f32.mrb[0].mxu0
  %v2000 = vadd.f32 0.0, %v1999
  %v2001 = vpop.f32.mrb[0].mxu0
  %v2002 = vadd.f32 0.0, %v2001
  %v2003 = vpop.f32.mrb[0].mxu0
  %v2004 = vadd.f32 0.0, %v2003
  %2005 = vmatprep.mubr.bf16.mxu0 0
  %2006 = vmatmul.mubr.bf16.gmra.mrb[0].mxu0 %v1758
  %v2007 = vpop.f32.mrb[0].mxu0
  %v2008 = vadd.f32 0.0, %v2007
  %v2009 = vpop.f32.mrb[0].mxu0
  %v2010 = vadd.f32 0.0, %v2009
  %v2011 = vpop.f32.mrb[0].mxu0
  %v2012 = vadd.f32 0.0, %v2011
  %v2013 = vpop.f32.mrb[0].mxu0
  %v2014 = vadd.f32 0.0, %v2013
  %2015 = vdwg.mxu0
  %2016 = vmatprep.subr.bf16.mxu0 %v1776
  %2017 = vmatpush1.bf16.msra.mxu0 %v1773
  %2018 = vmatprep.subr.bf16.mxu0 0
  %2019 = vmatpush1.bf16.msra.mxu0 0
  %2020 = vmatprep.subr.bf16.mxu0 0
  %2021 = vmatpush1.bf16.msra.mxu0 0
  %2022 = vmatprep.subr.bf16.mxu0 0
  %2023 = vmatpush1.bf16.msra.mxu0 0
  %2024 = vmatprep.subr.bf16.mxu0 0
  %2025 = vmatpush1.bf16.msra.mxu0 0
  %2026 = vmatprep.subr.bf16.mxu0 0
  %2027 = vmatpush1.bf16.msra.mxu0 0
  %2028 = vmatprep.subr.bf16.mxu0 0
  %2029 = vmatpush1.bf16.msra.mxu0 0
  %2030 = vmatprep.subr.bf16.mxu0 0
  %2031 = vmatpush1.bf16.msra.mxu0 0
  %2032 = vmatprep.subr.bf16.mxu0 0
  %2033 = vmatpush1.bf16.msra.mxu0 0
  %2034 = vmatprep.subr.bf16.mxu0 0
  %2035 = vmatpush1.bf16.msra.mxu0 0
  %2036 = vmatprep.subr.bf16.mxu0 0
  %2037 = vmatpush1.bf16.msra.mxu0 0
  %2038 = vmatprep.subr.bf16.mxu0 0
  %2039 = vmatpush1.bf16.msra.mxu0 0
  %2040 = vmatprep.subr.bf16.mxu0 0
  %2041 = vmatpush1.bf16.msra.mxu0 0
  %2042 = vmatprep.subr.bf16.mxu0 0
  %2043 = vmatpush1.bf16.msra.mxu0 0
  %2044 = vmatprep.subr.bf16.mxu0 0
  %2045 = vmatpush1.bf16.msra.mxu0 0
  %2046 = vmatprep.subr.bf16.mxu0 0
  %2047 = vmatpush1.bf16.msra.mxu0 0
  %2048 = vmatprep.mubr.bf16.mxu0 0
  %2049 = vmatmul.mubr.bf16.gmra.mrb[0].mxu0 %v1737
  %v2050 = vpop.f32.mrb[0].mxu0
  %v2051 = vadd.f32 0.0, %v2050
  %v2052 = vpop.f32.mrb[0].mxu0
  %v2053 = vadd.f32 0.0, %v2052
  %v2054 = vpop.f32.mrb[0].mxu0
  %v2055 = vadd.f32 0.0, %v2054
  %v2056 = vpop.f32.mrb[0].mxu0
  %v2057 = vadd.f32 0.0, %v2056
  %2058 = vmatprep.mubr.bf16.mxu0 0
  %2059 = vmatmul.mubr.bf16.gmra.mrb[0].mxu0 %v1740
  %v2060 = vpop.f32.mrb[0].mxu0
  %v2061 = vadd.f32 0.0, %v2060
  %v2062 = vpop.f32.mrb[0].mxu0
  %v2063 = vadd.f32 0.0, %v2062
  %v2064 = vpop.f32.mrb[0].mxu0
  %v2065 = vadd.f32 0.0, %v2064
  %v2066 = vpop.f32.mrb[0].mxu0
  %v2067 = vadd.f32 0.0, %v2066
  %2068 = vmatprep.mubr.bf16.mxu0 0
  %2069 = vmatmul.mubr.bf16.gmra.mrb[0].mxu0 %v1743
  %v2070 = vpop.f32.mrb[0].mxu0
  %v2071 = vadd.f32 0.0, %v2070
  %v2072 = vpop.f32.mrb[0].mxu0
  %v2073 = vadd.f32 0.0, %v2072
  %v2074 = vpop.f32.mrb[0].mxu0
  %v2075 = vadd.f32 0.0, %v2074
  %v2076 = vpop.f32.mrb[0].mxu0
  %v2077 = vadd.f32 0.0, %v2076
  %2078 = vmatprep.mubr.bf16.mxu0 0
  %2079 = vmatmul.mubr.bf16.gmra.mrb[0].mxu0 %v1746
  %v2080 = vpop.f32.mrb[0].mxu0
  %v2081 = vadd.f32 0.0, %v2080
  %v2082 = vpop.f32.mrb[0].mxu0
  %v2083 = vadd.f32 0.0, %v2082
  %v2084 = vpop.f32.mrb[0].mxu0
  %v2085 = vadd.f32 0.0, %v2084
  %v2086 = vpop.f32.mrb[0].mxu0
  %v2087 = vadd.f32 0.0, %v2086
  %2088 = vmatprep.mubr.bf16.mxu0 0
  %2089 = vmatmul.mubr.bf16.gmra.mrb[0].mxu0 %v1749
  %v2090 = vpop.f32.mrb[0].mxu0
  %v2091 = vadd.f32 0.0, %v2090
  %v2092 = vpop.f32.mrb[0].mxu0
  %v2093 = vadd.f32 0.0, %v2092
  %v2094 = vpop.f32.mrb[0].mxu0
  %v2095 = vadd.f32 0.0, %v2094
  %v2096 = vpop.f32.mrb[0].mxu0
  %v2097 = vadd.f32 0.0, %v2096
  %2098 = vmatprep.mubr.bf16.mxu0 0
  %2099 = vmatmul.mubr.bf16.gmra.mrb[0].mxu0 %v1752
  %v2100 = vpop.f32.mrb[0].mxu0
  %v2101 = vadd.f32 0.0, %v2100
  %v2102 = vpop.f32.mrb[0].mxu0
  %v2103 = vadd.f32 0.0, %v2102
  %v2104 = vpop.f32.mrb[0].mxu0
  %v2105 = vadd.f32 0.0, %v2104
  %v2106 = vpop.f32.mrb[0].mxu0
  %v2107 = vadd.f32 0.0, %v2106
  %2108 = vmatprep.mubr.bf16.mxu0 0
  %2109 = vmatmul.mubr.bf16.gmra.mrb[0].mxu0 %v1755
  %v2110 = vpop.f32.mrb[0].mxu0
  %v2111 = vadd.f32 0.0, %v2110
  %v2112 = vpop.f32.mrb[0].mxu0
  %v2113 = vadd.f32 0.0, %v2112
  %v2114 = vpop.f32.mrb[0].mxu0
  %v2115 = vadd.f32 0.0, %v2114
  %v2116 = vpop.f32.mrb[0].mxu0
  %v2117 = vadd.f32 0.0, %v2116
  %2118 = vmatprep.mubr.bf16.mxu0 0
  %2119 = vmatmul.mubr.bf16.gmra.mrb[0].mxu0 %v1758
  %v2120 = vpop.f32.mrb[0].mxu0
  %v2121 = vadd.f32 0.0, %v2120
  %v2122 = vpop.f32.mrb[0].mxu0
  %v2123 = vadd.f32 0.0, %v2122
  %v2124 = vpop.f32.mrb[0].mxu0
  %v2125 = vadd.f32 0.0, %v2124
  %v2126 = vpop.f32.mrb[0].mxu0
  %v2127 = vadd.f32 0.0, %v2126
  %2128 = vdwg.mxu0
  %2129 = vmatprep.subr.bf16.mxu0 %v1782
  %2130 = vmatpush1.bf16.msra.mxu0 %v1779
  %2131 = vmatprep.subr.bf16.mxu0 0
  %2132 = vmatpush1.bf16.msra.mxu0 0
  %2133 = vmatprep.subr.bf16.mxu0 0
  %2134 = vmatpush1.bf16.msra.mxu0 0
  %2135 = vmatprep.subr.bf16.mxu0 0
  %2136 = vmatpush1.bf16.msra.mxu0 0
  %2137 = vmatprep.subr.bf16.mxu0 0
  %2138 = vmatpush1.bf16.msra.mxu0 0
  %2139 = vmatprep.subr.bf16.mxu0 0
  %2140 = vmatpush1.bf16.msra.mxu0 0
  %2141 = vmatprep.subr.bf16.mxu0 0
  %2142 = vmatpush1.bf16.msra.mxu0 0
  %2143 = vmatprep.subr.bf16.mxu0 0
  %2144 = vmatpush1.bf16.msra.mxu0 0
  %2145 = vmatprep.subr.bf16.mxu0 0
  %2146 = vmatpush1.bf16.msra.mxu0 0
  %2147 = vmatprep.subr.bf16.mxu0 0
  %2148 = vmatpush1.bf16.msra.mxu0 0
  %2149 = vmatprep.subr.bf16.mxu0 0
  %2150 = vmatpush1.bf16.msra.mxu0 0
  %2151 = vmatprep.subr.bf16.mxu0 0
  %2152 = vmatpush1.bf16.msra.mxu0 0
  %2153 = vmatprep.subr.bf16.mxu0 0
  %2154 = vmatpush1.bf16.msra.mxu0 0
  %2155 = vmatprep.subr.bf16.mxu0 0
  %2156 = vmatpush1.bf16.msra.mxu0 0
  %2157 = vmatprep.subr.bf16.mxu0 0
  %2158 = vmatpush1.bf16.msra.mxu0 0
  %2159 = vmatprep.subr.bf16.mxu0 0
  %2160 = vmatpush1.bf16.msra.mxu0 0
  %2161 = vmatprep.mubr.bf16.mxu0 0
  %2162 = vmatmul.mubr.bf16.gmra.mrb[0].mxu0 %v1737
  %v2163 = vpop.f32.mrb[0].mxu0
  %v2164 = vadd.f32 0.0, %v2163
  %v2165 = vpop.f32.mrb[0].mxu0
  %v2166 = vadd.f32 0.0, %v2165
  %v2167 = vpop.f32.mrb[0].mxu0
  %v2168 = vadd.f32 0.0, %v2167
  %v2169 = vpop.f32.mrb[0].mxu0
  %v2170 = vadd.f32 0.0, %v2169
  %2171 = vmatprep.mubr.bf16.mxu0 0
  %2172 = vmatmul.mubr.bf16.gmra.mrb[0].mxu0 %v1740
  %v2173 = vpop.f32.mrb[0].mxu0
  %v2174 = vadd.f32 0.0, %v2173
  %v2175 = vpop.f32.mrb[0].mxu0
  %v2176 = vadd.f32 0.0, %v2175
  %v2177 = vpop.f32.mrb[0].mxu0
  %v2178 = vadd.f32 0.0, %v2177
  %v2179 = vpop.f32.mrb[0].mxu0
  %v2180 = vadd.f32 0.0, %v2179
  %2181 = vmatprep.mubr.bf16.mxu0 0
  %2182 = vmatmul.mubr.bf16.gmra.mrb[0].mxu0 %v1743
  %v2183 = vpop.f32.mrb[0].mxu0
  %v2184 = vadd.f32 0.0, %v2183
  %v2185 = vpop.f32.mrb[0].mxu0
  %v2186 = vadd.f32 0.0, %v2185
  %v2187 = vpop.f32.mrb[0].mxu0
  %v2188 = vadd.f32 0.0, %v2187
  %v2189 = vpop.f32.mrb[0].mxu0
  %v2190 = vadd.f32 0.0, %v2189
  %2191 = vmatprep.mubr.bf16.mxu0 0
  %2192 = vmatmul.mubr.bf16.gmra.mrb[0].mxu0 %v1746
  %v2193 = vpop.f32.mrb[0].mxu0
  %v2194 = vadd.f32 0.0, %v2193
  %v2195 = vpop.f32.mrb[0].mxu0
  %v2196 = vadd.f32 0.0, %v2195
  %v2197 = vpop.f32.mrb[0].mxu0
  %v2198 = vadd.f32 0.0, %v2197
  %v2199 = vpop.f32.mrb[0].mxu0
  %v2200 = vadd.f32 0.0, %v2199
  %2201 = vmatprep.mubr.bf16.mxu0 0
  %2202 = vmatmul.mubr.bf16.gmra.mrb[0].mxu0 %v1749
  %v2203 = vpop.f32.mrb[0].mxu0
  %v2204 = vadd.f32 0.0, %v2203
  %v2205 = vpop.f32.mrb[0].mxu0
  %v2206 = vadd.f32 0.0, %v2205
  %v2207 = vpop.f32.mrb[0].mxu0
  %v2208 = vadd.f32 0.0, %v2207
  %v2209 = vpop.f32.mrb[0].mxu0
  %v2210 = vadd.f32 0.0, %v2209
  %2211 = vmatprep.mubr.bf16.mxu0 0
  %2212 = vmatmul.mubr.bf16.gmra.mrb[0].mxu0 %v1752
  %v2213 = vpop.f32.mrb[0].mxu0
  %v2214 = vadd.f32 0.0, %v2213
  %v2215 = vpop.f32.mrb[0].mxu0
  %v2216 = vadd.f32 0.0, %v2215
  %v2217 = vpop.f32.mrb[0].mxu0
  %v2218 = vadd.f32 0.0, %v2217
  %v2219 = vpop.f32.mrb[0].mxu0
  %v2220 = vadd.f32 0.0, %v2219
  %2221 = vmatprep.mubr.bf16.mxu0 0
  %2222 = vmatmul.mubr.bf16.gmra.mrb[0].mxu0 %v1755
  %v2223 = vpop.f32.mrb[0].mxu0
  %v2224 = vadd.f32 0.0, %v2223
  %v2225 = vpop.f32.mrb[0].mxu0
  %v2226 = vadd.f32 0.0, %v2225
  %v2227 = vpop.f32.mrb[0].mxu0
  %v2228 = vadd.f32 0.0, %v2227
  %v2229 = vpop.f32.mrb[0].mxu0
  %v2230 = vadd.f32 0.0, %v2229
  %2231 = vmatprep.mubr.bf16.mxu0 0
  %2232 = vmatmul.mubr.bf16.gmra.mrb[0].mxu0 %v1758
  %v2233 = vpop.f32.mrb[0].mxu0
  %v2234 = vadd.f32 0.0, %v2233
  %v2235 = vpop.f32.mrb[0].mxu0
  %v2236 = vadd.f32 0.0, %v2235
  %v2237 = vpop.f32.mrb[0].mxu0
  %v2238 = vadd.f32 0.0, %v2237
  %v2239 = vpop.f32.mrb[0].mxu0
  %v2240 = vadd.f32 0.0, %v2239
  %2241 = vdwg.mxu0
  %2242 = vmatprep.subr.bf16.mxu0 %v1788
  %2243 = vmatpush1.bf16.msra.mxu0 %v1785
  %2244 = vmatprep.subr.bf16.mxu0 0
  %2245 = vmatpush1.bf16.msra.mxu0 0
  %2246 = vmatprep.subr.bf16.mxu0 0
  %2247 = vmatpush1.bf16.msra.mxu0 0
  %2248 = vmatprep.subr.bf16.mxu0 0
  %2249 = vmatpush1.bf16.msra.mxu0 0
  %2250 = vmatprep.subr.bf16.mxu0 0
  %2251 = vmatpush1.bf16.msra.mxu0 0
  %2252 = vmatprep.subr.bf16.mxu0 0
  %2253 = vmatpush1.bf16.msra.mxu0 0
  %2254 = vmatprep.subr.bf16.mxu0 0
  %2255 = vmatpush1.bf16.msra.mxu0 0
  %2256 = vmatprep.subr.bf16.mxu0 0
  %2257 = vmatpush1.bf16.msra.mxu0 0
  %2258 = vmatprep.subr.bf16.mxu0 0
  %2259 = vmatpush1.bf16.msra.mxu0 0
  %2260 = vmatprep.subr.bf16.mxu0 0
  %2261 = vmatpush1.bf16.msra.mxu0 0
  %2262 = vmatprep.subr.bf16.mxu0 0
  %2263 = vmatpush1.bf16.msra.mxu0 0
  %2264 = vmatprep.subr.bf16.mxu0 0
  %2265 = vmatpush1.bf16.msra.mxu0 0
  %2266 = vmatprep.subr.bf16.mxu0 0
  %2267 = vmatpush1.bf16.msra.mxu0 0
  %2268 = vmatprep.subr.bf16.mxu0 0
  %2269 = vmatpush1.bf16.msra.mxu0 0
  %2270 = vmatprep.subr.bf16.mxu0 0
  %2271 = vmatpush1.bf16.msra.mxu0 0
  %2272 = vmatprep.subr.bf16.mxu0 0
  %2273 = vmatpush1.bf16.msra.mxu0 0
  %2274 = vmatprep.mubr.bf16.mxu0 0
  %2275 = vmatmul.mubr.bf16.gmra.mrb[0].mxu0 %v1737
  %v2276 = vpop.f32.mrb[0].mxu0
  %v2277 = vadd.f32 0.0, %v2276
  %v2278 = vpop.f32.mrb[0].mxu0
  %v2279 = vadd.f32 0.0, %v2278
  %v2280 = vpop.f32.mrb[0].mxu0
  %v2281 = vadd.f32 0.0, %v2280
  %v2282 = vpop.f32.mrb[0].mxu0
  %v2283 = vadd.f32 0.0, %v2282
  %2284 = vmatprep.mubr.bf16.mxu0 0
  %2285 = vmatmul.mubr.bf16.gmra.mrb[0].mxu0 %v1740
  %v2286 = vpop.f32.mrb[0].mxu0
  %v2287 = vadd.f32 0.0, %v2286
  %v2288 = vpop.f32.mrb[0].mxu0
  %v2289 = vadd.f32 0.0, %v2288
  %v2290 = vpop.f32.mrb[0].mxu0
  %v2291 = vadd.f32 0.0, %v2290
  %v2292 = vpop.f32.mrb[0].mxu0
  %v2293 = vadd.f32 0.0, %v2292
  %2294 = vmatprep.mubr.bf16.mxu0 0
  %2295 = vmatmul.mubr.bf16.gmra.mrb[0].mxu0 %v1743
  %v2296 = vpop.f32.mrb[0].mxu0
  %v2297 = vadd.f32 0.0, %v2296
  %v2298 = vpop.f32.mrb[0].mxu0
  %v2299 = vadd.f32 0.0, %v2298
  %v2300 = vpop.f32.mrb[0].mxu0
  %v2301 = vadd.f32 0.0, %v2300
  %v2302 = vpop.f32.mrb[0].mxu0
  %v2303 = vadd.f32 0.0, %v2302
  %2304 = vmatprep.mubr.bf16.mxu0 0
  %2305 = vmatmul.mubr.bf16.gmra.mrb[0].mxu0 %v1746
  %v2306 = vpop.f32.mrb[0].mxu0
  %v2307 = vadd.f32 0.0, %v2306
  %v2308 = vpop.f32.mrb[0].mxu0
  %v2309 = vadd.f32 0.0, %v2308
  %v2310 = vpop.f32.mrb[0].mxu0
  %v2311 = vadd.f32 0.0, %v2310
  %v2312 = vpop.f32.mrb[0].mxu0
  %v2313 = vadd.f32 0.0, %v2312
  %2314 = vmatprep.mubr.bf16.mxu0 0
  %2315 = vmatmul.mubr.bf16.gmra.mrb[0].mxu0 %v1749
  %v2316 = vpop.f32.mrb[0].mxu0
  %v2317 = vadd.f32 0.0, %v2316
  %v2318 = vpop.f32.mrb[0].mxu0
  %v2319 = vadd.f32 0.0, %v2318
  %v2320 = vpop.f32.mrb[0].mxu0
  %v2321 = vadd.f32 0.0, %v2320
  %v2322 = vpop.f32.mrb[0].mxu0
  %v2323 = vadd.f32 0.0, %v2322
  %2324 = vmatprep.mubr.bf16.mxu0 0
  %2325 = vmatmul.mubr.bf16.gmra.mrb[0].mxu0 %v1752
  %v2326 = vpop.f32.mrb[0].mxu0
  %v2327 = vadd.f32 0.0, %v2326
  %v2328 = vpop.f32.mrb[0].mxu0
  %v2329 = vadd.f32 0.0, %v2328
  %v2330 = vpop.f32.mrb[0].mxu0
  %v2331 = vadd.f32 0.0, %v2330
  %v2332 = vpop.f32.mrb[0].mxu0
  %v2333 = vadd.f32 0.0, %v2332
  %2334 = vmatprep.mubr.bf16.mxu0 0
  %2335 = vmatmul.mubr.bf16.gmra.mrb[0].mxu0 %v1755
  %v2336 = vpop.f32.mrb[0].mxu0
  %v2337 = vadd.f32 0.0, %v2336
  %v2338 = vpop.f32.mrb[0].mxu0
  %v2339 = vadd.f32 0.0, %v2338
  %v2340 = vpop.f32.mrb[0].mxu0
  %v2341 = vadd.f32 0.0, %v2340
  %v2342 = vpop.f32.mrb[0].mxu0
  %v2343 = vadd.f32 0.0, %v2342
  %2344 = vmatprep.mubr.bf16.mxu0 0
  %2345 = vmatmul.mubr.bf16.gmra.mrb[0].mxu0 %v1758
  %v2346 = vpop.f32.mrb[0].mxu0
  %v2347 = vadd.f32 0.0, %v2346
  %v2348 = vpop.f32.mrb[0].mxu0
  %v2349 = vadd.f32 0.0, %v2348
  %v2350 = vpop.f32.mrb[0].mxu0
  %v2351 = vadd.f32 0.0, %v2350
  %v2352 = vpop.f32.mrb[0].mxu0
  %v2353 = vadd.f32 0.0, %v2352
  %2354 = vdwg.mxu0
  %v2355 = vadd.f32 %v1167, %v1825
  %v2356 = vadd.f32 %v1169, %v1827
  %v2357 = vadd.f32 %v1280, %v1938
  %v2358 = vadd.f32 %v1282, %v1940
  %v2359 = vadd.f32 %v1393, %v2051
  %v2360 = vadd.f32 %v1395, %v2053
  %v2361 = vadd.f32 %v1506, %v2164
  %v2362 = vadd.f32 %v1508, %v2166
  %v2363 = vadd.f32 %v1619, %v2277
  %v2364 = vadd.f32 %v1621, %v2279
  %v2365 = vadd.f32 %v1171, %v1829
  %v2366 = vadd.f32 %v1173, %v1831
  %v2367 = vadd.f32 %v1284, %v1942
  %v2368 = vadd.f32 %v1286, %v1944
  %v2369 = vadd.f32 %v1397, %v2055
  %v2370 = vadd.f32 %v1399, %v2057
  %v2371 = vadd.f32 %v1510, %v2168
  %v2372 = vadd.f32 %v1512, %v2170
  %v2373 = vadd.f32 %v1623, %v2281
  %v2374 = vadd.f32 %v1625, %v2283
  %v2375 = vadd.f32 %v1177, %v1835
  %v2376 = vadd.f32 %v1179, %v1837
  %v2377 = vadd.f32 %v1290, %v1948
  %v2378 = vadd.f32 %v1292, %v1950
  %v2379 = vadd.f32 %v1403, %v2061
  %v2380 = vadd.f32 %v1405, %v2063
  %v2381 = vadd.f32 %v1516, %v2174
  %v2382 = vadd.f32 %v1518, %v2176
  %v2383 = vadd.f32 %v1629, %v2287
  %v2384 = vadd.f32 %v1631, %v2289
  %v2385 = vadd.f32 %v1181, %v1839
  %v2386 = vadd.f32 %v1183, %v1841
  %v2387 = vadd.f32 %v1294, %v1952
  %v2388 = vadd.f32 %v1296, %v1954
  %v2389 = vadd.f32 %v1407, %v2065
  %v2390 = vadd.f32 %v1409, %v2067
  %v2391 = vadd.f32 %v1520, %v2178
  %v2392 = vadd.f32 %v1522, %v2180
  %v2393 = vadd.f32 %v1633, %v2291
  %v2394 = vadd.f32 %v1635, %v2293
  %v2395 = vadd.f32 %v1187, %v1845
  %v2396 = vadd.f32 %v1189, %v1847
  %v2397 = vadd.f32 %v1300, %v1958
  %v2398 = vadd.f32 %v1302, %v1960
  %v2399 = vadd.f32 %v1413, %v2071
  %v2400 = vadd.f32 %v1415, %v2073
  %v2401 = vadd.f32 %v1526, %v2184
  %v2402 = vadd.f32 %v1528, %v2186
  %v2403 = vadd.f32 %v1639, %v2297
  %v2404 = vadd.f32 %v1641, %v2299
  %v2405 = vadd.f32 %v1191, %v1849
  %v2406 = vadd.f32 %v1193, %v1851
  %v2407 = vadd.f32 %v1304, %v1962
  %v2408 = vadd.f32 %v1306, %v1964
  %v2409 = vadd.f32 %v1417, %v2075
  %v2410 = vadd.f32 %v1419, %v2077
  %v2411 = vadd.f32 %v1530, %v2188
  %v2412 = vadd.f32 %v1532, %v2190
  %v2413 = vadd.f32 %v1643, %v2301
  %v2414 = vadd.f32 %v1645, %v2303
  %v2415 = vadd.f32 %v1197, %v1855
  %v2416 = vadd.f32 %v1199, %v1857
  %v2417 = vadd.f32 %v1310, %v1968
  %v2418 = vadd.f32 %v1312, %v1970
  %v2419 = vadd.f32 %v1423, %v2081
  %v2420 = vadd.f32 %v1425, %v2083
  %v2421 = vadd.f32 %v1536, %v2194
  %v2422 = vadd.f32 %v1538, %v2196
  %v2423 = vadd.f32 %v1649, %v2307
  %v2424 = vadd.f32 %v1651, %v2309
  %v2425 = vadd.f32 %v1201, %v1859
  %v2426 = vadd.f32 %v1203, %v1861
  %v2427 = vadd.f32 %v1314, %v1972
  %v2428 = vadd.f32 %v1316, %v1974
  %v2429 = vadd.f32 %v1427, %v2085
  %v2430 = vadd.f32 %v1429, %v2087
  %v2431 = vadd.f32 %v1540, %v2198
  %v2432 = vadd.f32 %v1542, %v2200
  %v2433 = vadd.f32 %v1653, %v2311
  %v2434 = vadd.f32 %v1655, %v2313
  %v2435 = vadd.f32 %v1207, %v1865
  %v2436 = vadd.f32 %v1209, %v1867
  %v2437 = vadd.f32 %v1320, %v1978
  %v2438 = vadd.f32 %v1322, %v1980
  %v2439 = vadd.f32 %v1433, %v2091
  %v2440 = vadd.f32 %v1435, %v2093
  %v2441 = vadd.f32 %v1546, %v2204
  %v2442 = vadd.f32 %v1548, %v2206
  %v2443 = vadd.f32 %v1659, %v2317
  %v2444 = vadd.f32 %v1661, %v2319
  %v2445 = vadd.f32 %v1211, %v1869
  %v2446 = vadd.f32 %v1213, %v1871
  %v2447 = vadd.f32 %v1324, %v1982
  %v2448 = vadd.f32 %v1326, %v1984
  %v2449 = vadd.f32 %v1437, %v2095
  %v2450 = vadd.f32 %v1439, %v2097
  %v2451 = vadd.f32 %v1550, %v2208
  %v2452 = vadd.f32 %v1552, %v2210
  %v2453 = vadd.f32 %v1663, %v2321
  %v2454 = vadd.f32 %v1665, %v2323
  %v2455 = vadd.f32 %v1217, %v1875
  %v2456 = vadd.f32 %v1219, %v1877
  %v2457 = vadd.f32 %v1330, %v1988
  %v2458 = vadd.f32 %v1332, %v1990
  %v2459 = vadd.f32 %v1443, %v2101
  %v2460 = vadd.f32 %v1445, %v2103
  %v2461 = vadd.f32 %v1556, %v2214
  %v2462 = vadd.f32 %v1558, %v2216
  %v2463 = vadd.f32 %v1669, %v2327
  %v2464 = vadd.f32 %v1671, %v2329
  %v2465 = vadd.f32 %v1221, %v1879
  %v2466 = vadd.f32 %v1223, %v1881
  %v2467 = vadd.f32 %v1334, %v1992
  %v2468 = vadd.f32 %v1336, %v1994
  %v2469 = vadd.f32 %v1447, %v2105
  %v2470 = vadd.f32 %v1449, %v2107
  %v2471 = vadd.f32 %v1560, %v2218
  %v2472 = vadd.f32 %v1562, %v2220
  %v2473 = vadd.f32 %v1673, %v2331
  %v2474 = vadd.f32 %v1675, %v2333
  %v2475 = vadd.f32 %v1227, %v1885
  %v2476 = vadd.f32 %v1229, %v1887
  %v2477 = vadd.f32 %v1340, %v1998
  %v2478 = vadd.f32 %v1342, %v2000
  %v2479 = vadd.f32 %v1453, %v2111
  %v2480 = vadd.f32 %v1455, %v2113
  %v2481 = vadd.f32 %v1566, %v2224
  %v2482 = vadd.f32 %v1568, %v2226
  %v2483 = vadd.f32 %v1679, %v2337
  %v2484 = vadd.f32 %v1681, %v2339
  %v2485 = vadd.f32 %v1231, %v1889
  %v2486 = vadd.f32 %v1233, %v1891
  %v2487 = vadd.f32 %v1344, %v2002
  %v2488 = vadd.f32 %v1346, %v2004
  %v2489 = vadd.f32 %v1457, %v2115
  %v2490 = vadd.f32 %v1459, %v2117
  %v2491 = vadd.f32 %v1570, %v2228
  %v2492 = vadd.f32 %v1572, %v2230
  %v2493 = vadd.f32 %v1683, %v2341
  %v2494 = vadd.f32 %v1685, %v2343
  %v2495 = vadd.f32 %v1237, %v1895
  %v2496 = vadd.f32 %v1239, %v1897
  %v2497 = vadd.f32 %v1350, %v2008
  %v2498 = vadd.f32 %v1352, %v2010
  %v2499 = vadd.f32 %v1463, %v2121
  %v2500 = vadd.f32 %v1465, %v2123
  %v2501 = vadd.f32 %v1576, %v2234
  %v2502 = vadd.f32 %v1578, %v2236
  %v2503 = vadd.f32 %v1689, %v2347
  %v2504 = vadd.f32 %v1691, %v2349
  %v2505 = vadd.f32 %v1241, %v1899
  %v2506 = vadd.f32 %v1243, %v1901
  %v2507 = vadd.f32 %v1354, %v2012
  %v2508 = vadd.f32 %v1356, %v2014
  %v2509 = vadd.f32 %v1467, %v2125
  %v2510 = vadd.f32 %v1469, %v2127
  %v2511 = vadd.f32 %v1580, %v2238
  %v2512 = vadd.f32 %v1582, %v2240
  %v2513 = vadd.f32 %v1693, %v2351
  %v2514 = vadd.f32 %v1695, %v2353
  %v2515 = vld [vmem:[%s3] sm:$0xff]
  %v2516 = vld [vmem:[%s3 + $0x8] sm:$0x3]
  %v2519 = vlaneseq
  %v2520 = vshrl.u32 %v2519, 7
  %v2521 = vsub.s32 0, %v2520
  %v2522 = vrot.slane %v2515, %v2521
  %v2523 = vlaneseq
  %v2524 = vshrl.u32 %v2523, 7
  %v2525 = vsub.s32 1, %v2524
  %v2526 = vrot.slane %v2515, %v2525
  %v2527 = vlaneseq
  %v2528 = vshrl.u32 %v2527, 7
  %v2529 = vsub.s32 2, %v2528
  %v2530 = vrot.slane %v2515, %v2529
  %v2531 = vlaneseq
  %v2532 = vshrl.u32 %v2531, 7
  %v2533 = vsub.s32 3, %v2532
  %v2534 = vrot.slane %v2515, %v2533
  %v2535 = vlaneseq
  %v2536 = vshrl.u32 %v2535, 7
  %v2537 = vsub.s32 4, %v2536
  %v2538 = vrot.slane %v2515, %v2537
  %v2539 = vlaneseq
  %v2540 = vshrl.u32 %v2539, 7
  %v2541 = vsub.s32 5, %v2540
  %v2542 = vrot.slane %v2515, %v2541
  %v2543 = vlaneseq
  %v2544 = vshrl.u32 %v2543, 7
  %v2545 = vsub.s32 6, %v2544
  %v2546 = vrot.slane %v2515, %v2545
  %v2547 = vlaneseq
  %v2548 = vshrl.u32 %v2547, 7
  %v2549 = vsub.s32 7, %v2548
  %v2550 = vrot.slane %v2515, %v2549
  %v2551 = vlaneseq
  %v2552 = vshrl.u32 %v2551, 7
  %v2553 = vsub.s32 0, %v2552
  %v2554 = vrot.slane %v2516, %v2553
  %v2555 = vlaneseq
  %v2556 = vshrl.u32 %v2555, 7
  %v2557 = vsub.s32 1, %v2556
  %v2558 = vrot.slane %v2516, %v2557
  %v2569 = vadd.f32 %v2355, %v2522
  %v2570 = vadd.f32 %v2356, %v2526
  %v2571 = vadd.f32 %v2357, %v2530
  %v2572 = vadd.f32 %v2358, %v2534
  %v2573 = vadd.f32 %v2359, %v2538
  %v2574 = vadd.f32 %v2360, %v2542
  %v2575 = vadd.f32 %v2361, %v2546
  %v2576 = vadd.f32 %v2362, %v2550
  %v2577 = vadd.f32 %v2363, %v2554
  %v2578 = vadd.f32 %v2364, %v2558
  %v2579 = vadd.f32 %v2365, %v2522
  %v2580 = vadd.f32 %v2366, %v2526
  %v2581 = vadd.f32 %v2367, %v2530
  %v2582 = vadd.f32 %v2368, %v2534
  %v2583 = vadd.f32 %v2369, %v2538
  %v2584 = vadd.f32 %v2370, %v2542
  %v2585 = vadd.f32 %v2371, %v2546
  %v2586 = vadd.f32 %v2372, %v2550
  %v2587 = vadd.f32 %v2373, %v2554
  %v2588 = vadd.f32 %v2374, %v2558
  %v2589 = vadd.f32 %v2375, %v2522
  %v2590 = vadd.f32 %v2376, %v2526
  %v2591 = vadd.f32 %v2377, %v2530
  %v2592 = vadd.f32 %v2378, %v2534
  %v2593 = vadd.f32 %v2379, %v2538
  %v2594 = vadd.f32 %v2380, %v2542
  %v2595 = vadd.f32 %v2381, %v2546
  %v2596 = vadd.f32 %v2382, %v2550
  %v2597 = vadd.f32 %v2383, %v2554
  %v2598 = vadd.f32 %v2384, %v2558
  %v2599 = vadd.f32 %v2385, %v2522
  %v2600 = vadd.f32 %v2386, %v2526
  %v2601 = vadd.f32 %v2387, %v2530
  %v2602 = vadd.f32 %v2388, %v2534
  %v2603 = vadd.f32 %v2389, %v2538
  %v2604 = vadd.f32 %v2390, %v2542
  %v2605 = vadd.f32 %v2391, %v2546
  %v2606 = vadd.f32 %v2392, %v2550
  %v2607 = vadd.f32 %v2393, %v2554
  %v2608 = vadd.f32 %v2394, %v2558
  %v2609 = vadd.f32 %v2395, %v2522
  %v2610 = vadd.f32 %v2396, %v2526
  %v2611 = vadd.f32 %v2397, %v2530
  %v2612 = vadd.f32 %v2398, %v2534
  %v2613 = vadd.f32 %v2399, %v2538
  %v2614 = vadd.f32 %v2400, %v2542
  %v2615 = vadd.f32 %v2401, %v2546
  %v2616 = vadd.f32 %v2402, %v2550
  %v2617 = vadd.f32 %v2403, %v2554
  %v2618 = vadd.f32 %v2404, %v2558
  %v2619 = vadd.f32 %v2405, %v2522
  %v2620 = vadd.f32 %v2406, %v2526
  %v2621 = vadd.f32 %v2407, %v2530
  %v2622 = vadd.f32 %v2408, %v2534
  %v2623 = vadd.f32 %v2409, %v2538
  %v2624 = vadd.f32 %v2410, %v2542
  %v2625 = vadd.f32 %v2411, %v2546
  %v2626 = vadd.f32 %v2412, %v2550
  %v2627 = vadd.f32 %v2413, %v2554
  %v2628 = vadd.f32 %v2414, %v2558
  %v2629 = vadd.f32 %v2415, %v2522
  %v2630 = vadd.f32 %v2416, %v2526
  %v2631 = vadd.f32 %v2417, %v2530
  %v2632 = vadd.f32 %v2418, %v2534
  %v2633 = vadd.f32 %v2419, %v2538
  %v2634 = vadd.f32 %v2420, %v2542
  %v2635 = vadd.f32 %v2421, %v2546
  %v2636 = vadd.f32 %v2422, %v2550
  %v2637 = vadd.f32 %v2423, %v2554
  %v2638 = vadd.f32 %v2424, %v2558
  %v2639 = vadd.f32 %v2425, %v2522
  %v2640 = vadd.f32 %v2426, %v2526
  %v2641 = vadd.f32 %v2427, %v2530
  %v2642 = vadd.f32 %v2428, %v2534
  %v2643 = vadd.f32 %v2429, %v2538
  %v2644 = vadd.f32 %v2430, %v2542
  %v2645 = vadd.f32 %v2431, %v2546
  %v2646 = vadd.f32 %v2432, %v2550
  %v2647 = vadd.f32 %v2433, %v2554
  %v2648 = vadd.f32 %v2434, %v2558
  %v2649 = vadd.f32 %v2435, %v2522
  %v2650 = vadd.f32 %v2436, %v2526
  %v2651 = vadd.f32 %v2437, %v2530
  %v2652 = vadd.f32 %v2438, %v2534
  %v2653 = vadd.f32 %v2439, %v2538
  %v2654 = vadd.f32 %v2440, %v2542
  %v2655 = vadd.f32 %v2441, %v2546
  %v2656 = vadd.f32 %v2442, %v2550
  %v2657 = vadd.f32 %v2443, %v2554
  %v2658 = vadd.f32 %v2444, %v2558
  %v2659 = vadd.f32 %v2445, %v2522
  %v2660 = vadd.f32 %v2446, %v2526
  %v2661 = vadd.f32 %v2447, %v2530
  %v2662 = vadd.f32 %v2448, %v2534
  %v2663 = vadd.f32 %v2449, %v2538
  %v2664 = vadd.f32 %v2450, %v2542
  %v2665 = vadd.f32 %v2451, %v2546
  %v2666 = vadd.f32 %v2452, %v2550
  %v2667 = vadd.f32 %v2453, %v2554
  %v2668 = vadd.f32 %v2454, %v2558
  %v2669 = vadd.f32 %v2455, %v2522
  %v2670 = vadd.f32 %v2456, %v2526
  %v2671 = vadd.f32 %v2457, %v2530
  %v2672 = vadd.f32 %v2458, %v2534
  %v2673 = vadd.f32 %v2459, %v2538
  %v2674 = vadd.f32 %v2460, %v2542
  %v2675 = vadd.f32 %v2461, %v2546
  %v2676 = vadd.f32 %v2462, %v2550
  %v2677 = vadd.f32 %v2463, %v2554
  %v2678 = vadd.f32 %v2464, %v2558
  %v2679 = vadd.f32 %v2465, %v2522
  %v2680 = vadd.f32 %v2466, %v2526
  %v2681 = vadd.f32 %v2467, %v2530
  %v2682 = vadd.f32 %v2468, %v2534
  %v2683 = vadd.f32 %v2469, %v2538
  %v2684 = vadd.f32 %v2470, %v2542
  %v2685 = vadd.f32 %v2471, %v2546
  %v2686 = vadd.f32 %v2472, %v2550
  %v2687 = vadd.f32 %v2473, %v2554
  %v2688 = vadd.f32 %v2474, %v2558
  %v2689 = vadd.f32 %v2475, %v2522
  %v2690 = vadd.f32 %v2476, %v2526
  %v2691 = vadd.f32 %v2477, %v2530
  %v2692 = vadd.f32 %v2478, %v2534
  %v2693 = vadd.f32 %v2479, %v2538
  %v2694 = vadd.f32 %v2480, %v2542
  %v2695 = vadd.f32 %v2481, %v2546
  %v2696 = vadd.f32 %v2482, %v2550
  %v2697 = vadd.f32 %v2483, %v2554
  %v2698 = vadd.f32 %v2484, %v2558
  %v2699 = vadd.f32 %v2485, %v2522
  %v2700 = vadd.f32 %v2486, %v2526
  %v2701 = vadd.f32 %v2487, %v2530
  %v2702 = vadd.f32 %v2488, %v2534
  %v2703 = vadd.f32 %v2489, %v2538
  %v2704 = vadd.f32 %v2490, %v2542
  %v2705 = vadd.f32 %v2491, %v2546
  %v2706 = vadd.f32 %v2492, %v2550
  %v2707 = vadd.f32 %v2493, %v2554
  %v2708 = vadd.f32 %v2494, %v2558
  %v2709 = vadd.f32 %v2495, %v2522
  %v2710 = vadd.f32 %v2496, %v2526
  %v2711 = vadd.f32 %v2497, %v2530
  %v2712 = vadd.f32 %v2498, %v2534
  %v2713 = vadd.f32 %v2499, %v2538
  %v2714 = vadd.f32 %v2500, %v2542
  %v2715 = vadd.f32 %v2501, %v2546
  %v2716 = vadd.f32 %v2502, %v2550
  %v2717 = vadd.f32 %v2503, %v2554
  %v2718 = vadd.f32 %v2504, %v2558
  %v2719 = vadd.f32 %v2505, %v2522
  %v2720 = vadd.f32 %v2506, %v2526
  %v2721 = vadd.f32 %v2507, %v2530
  %v2722 = vadd.f32 %v2508, %v2534
  %v2723 = vadd.f32 %v2509, %v2538
  %v2724 = vadd.f32 %v2510, %v2542
  %v2725 = vadd.f32 %v2511, %v2546
  %v2726 = vadd.f32 %v2512, %v2550
  %v2727 = vadd.f32 %v2513, %v2554
  %v2728 = vadd.f32 %v2514, %v2558
  %2729 = vst [vmem:[%s4] sm:$0xff] %v2569
  %2730 = vst [vmem:[%s4 + $0x8] sm:$0xff] %v2570
  %2731 = vst [vmem:[%s4 + $0x10] sm:$0xff] %v2571
  %2732 = vst [vmem:[%s4 + $0x18] sm:$0xff] %v2572
  %2733 = vst [vmem:[%s4 + $0x20] sm:$0xff] %v2573
  %2734 = vst [vmem:[%s4 + $0x28] sm:$0xff] %v2574
  %2735 = vst [vmem:[%s4 + $0x30] sm:$0xff] %v2575
  %2736 = vst [vmem:[%s4 + $0x38] sm:$0xff] %v2576
  %2737 = vst [vmem:[%s4 + $0x40] sm:$0xff] %v2577
  %2738 = vst [vmem:[%s4 + $0x48] sm:$0xff] %v2578
  %2739 = vst [vmem:[%s4 + $0x50] sm:$0xff] %v2579
  %2740 = vst [vmem:[%s4 + $0x58] sm:$0xff] %v2580
  %2741 = vst [vmem:[%s4 + $0x60] sm:$0xff] %v2581
  %2742 = vst [vmem:[%s4 + $0x68] sm:$0xff] %v2582
  %2743 = vst [vmem:[%s4 + $0x70] sm:$0xff] %v2583
  %2744 = vst [vmem:[%s4 + $0x78] sm:$0xff] %v2584
  %2745 = vst [vmem:[%s4 + $0x80] sm:$0xff] %v2585
  %2746 = vst [vmem:[%s4 + $0x88] sm:$0xff] %v2586
  %2747 = vst [vmem:[%s4 + $0x90] sm:$0xff] %v2587
  %2748 = vst [vmem:[%s4 + $0x98] sm:$0xff] %v2588
  %2749 = vst [vmem:[%s4 + $0xa0] sm:$0xff] %v2589
  %2750 = vst [vmem:[%s4 + $0xa8] sm:$0xff] %v2590
  %2751 = vst [vmem:[%s4 + $0xb0] sm:$0xff] %v2591
  %2752 = vst [vmem:[%s4 + $0xb8] sm:$0xff] %v2592
  %2753 = vst [vmem:[%s4 + $0xc0] sm:$0xff] %v2593
  %2754 = vst [vmem:[%s4 + $0xc8] sm:$0xff] %v2594
  %2755 = vst [vmem:[%s4 + $0xd0] sm:$0xff] %v2595
  %2756 = vst [vmem:[%s4 + $0xd8] sm:$0xff] %v2596
  %2757 = vst [vmem:[%s4 + $0xe0] sm:$0xff] %v2597
  %2758 = vst [vmem:[%s4 + $0xe8] sm:$0xff] %v2598
  %2759 = vst [vmem:[%s4 + $0xf0] sm:$0xff] %v2599
  %2760 = vst [vmem:[%s4 + $0xf8] sm:$0xff] %v2600
  %2761 = vst [vmem:[%s4 + $0x100] sm:$0xff] %v2601
  %2762 = vst [vmem:[%s4 + $0x108] sm:$0xff] %v2602
  %2763 = vst [vmem:[%s4 + $0x110] sm:$0xff] %v2603
  %2764 = vst [vmem:[%s4 + $0x118] sm:$0xff] %v2604
  %2765 = vst [vmem:[%s4 + $0x120] sm:$0xff] %v2605
  %2766 = vst [vmem:[%s4 + $0x128] sm:$0xff] %v2606
  %2767 = vst [vmem:[%s4 + $0x130] sm:$0xff] %v2607
  %2768 = vst [vmem:[%s4 + $0x138] sm:$0xff] %v2608
  %2769 = vst [vmem:[%s4 + $0x140] sm:$0xff] %v2609
  %2770 = vst [vmem:[%s4 + $0x148] sm:$0xff] %v2610
  %2771 = vst [vmem:[%s4 + $0x150] sm:$0xff] %v2611
  %2772 = vst [vmem:[%s4 + $0x158] sm:$0xff] %v2612
  %2773 = vst [vmem:[%s4 + $0x160] sm:$0xff] %v2613
  %2774 = vst [vmem:[%s4 + $0x168] sm:$0xff] %v2614
  %2775 = vst [vmem:[%s4 + $0x170] sm:$0xff] %v2615
  %2776 = vst [vmem:[%s4 + $0x178] sm:$0xff] %v2616
  %2777 = vst [vmem:[%s4 + $0x180] sm:$0xff] %v2617
  %2778 = vst [vmem:[%s4 + $0x188] sm:$0xff] %v2618
  %2779 = vst [vmem:[%s4 + $0x190] sm:$0xff] %v2619
  %2780 = vst [vmem:[%s4 + $0x198] sm:$0xff] %v2620
  %2781 = vst [vmem:[%s4 + $0x1a0] sm:$0xff] %v2621
  %2782 = vst [vmem:[%s4 + $0x1a8] sm:$0xff] %v2622
  %2783 = vst [vmem:[%s4 + $0x1b0] sm:$0xff] %v2623
  %2784 = vst [vmem:[%s4 + $0x1b8] sm:$0xff] %v2624
  %2785 = vst [vmem:[%s4 + $0x1c0] sm:$0xff] %v2625
  %2786 = vst [vmem:[%s4 + $0x1c8] sm:$0xff] %v2626
  %2787 = vst [vmem:[%s4 + $0x1d0] sm:$0xff] %v2627
  %2788 = vst [vmem:[%s4 + $0x1d8] sm:$0xff] %v2628
  %2789 = vst [vmem:[%s4 + $0x1e0] sm:$0xff] %v2629
  %2790 = vst [vmem:[%s4 + $0x1e8] sm:$0xff] %v2630
  %2791 = vst [vmem:[%s4 + $0x1f0] sm:$0xff] %v2631
  %2792 = vst [vmem:[%s4 + $0x1f8] sm:$0xff] %v2632
  %2793 = vst [vmem:[%s4 + $0x200] sm:$0xff] %v2633
  %2794 = vst [vmem:[%s4 + $0x208] sm:$0xff] %v2634
  %2795 = vst [vmem:[%s4 + $0x210] sm:$0xff] %v2635
  %2796 = vst [vmem:[%s4 + $0x218] sm:$0xff] %v2636
  %2797 = vst [vmem:[%s4 + $0x220] sm:$0xff] %v2637
  %2798 = vst [vmem:[%s4 + $0x228] sm:$0xff] %v2638
  %2799 = vst [vmem:[%s4 + $0x230] sm:$0xff] %v2639
  %2800 = vst [vmem:[%s4 + $0x238] sm:$0xff] %v2640
  %2801 = vst [vmem:[%s4 + $0x240] sm:$0xff] %v2641
  %2802 = vst [vmem:[%s4 + $0x248] sm:$0xff] %v2642
  %2803 = vst [vmem:[%s4 + $0x250] sm:$0xff] %v2643
  %2804 = vst [vmem:[%s4 + $0x258] sm:$0xff] %v2644
  %2805 = vst [vmem:[%s4 + $0x260] sm:$0xff] %v2645
  %2806 = vst [vmem:[%s4 + $0x268] sm:$0xff] %v2646
  %2807 = vst [vmem:[%s4 + $0x270] sm:$0xff] %v2647
  %2808 = vst [vmem:[%s4 + $0x278] sm:$0xff] %v2648
  %2809 = vst [vmem:[%s4 + $0x280] sm:$0xff] %v2649
  %2810 = vst [vmem:[%s4 + $0x288] sm:$0xff] %v2650
  %2811 = vst [vmem:[%s4 + $0x290] sm:$0xff] %v2651
  %2812 = vst [vmem:[%s4 + $0x298] sm:$0xff] %v2652
  %2813 = vst [vmem:[%s4 + $0x2a0] sm:$0xff] %v2653
  %2814 = vst [vmem:[%s4 + $0x2a8] sm:$0xff] %v2654
  %2815 = vst [vmem:[%s4 + $0x2b0] sm:$0xff] %v2655
  %2816 = vst [vmem:[%s4 + $0x2b8] sm:$0xff] %v2656
  %2817 = vst [vmem:[%s4 + $0x2c0] sm:$0xff] %v2657
  %2818 = vst [vmem:[%s4 + $0x2c8] sm:$0xff] %v2658
  %2819 = vst [vmem:[%s4 + $0x2d0] sm:$0xff] %v2659
  %2820 = vst [vmem:[%s4 + $0x2d8] sm:$0xff] %v2660
  %2821 = vst [vmem:[%s4 + $0x2e0] sm:$0xff] %v2661
  %2822 = vst [vmem:[%s4 + $0x2e8] sm:$0xff] %v2662
  %2823 = vst [vmem:[%s4 + $0x2f0] sm:$0xff] %v2663
  %2824 = vst [vmem:[%s4 + $0x2f8] sm:$0xff] %v2664
  %2825 = vst [vmem:[%s4 + $0x300] sm:$0xff] %v2665
  %2826 = vst [vmem:[%s4 + $0x308] sm:$0xff] %v2666
  %2827 = vst [vmem:[%s4 + $0x310] sm:$0xff] %v2667
  %2828 = vst [vmem:[%s4 + $0x318] sm:$0xff] %v2668
  %2829 = vst [vmem:[%s4 + $0x320] sm:$0xff] %v2669
  %2830 = vst [vmem:[%s4 + $0x328] sm:$0xff] %v2670
  %2831 = vst [vmem:[%s4 + $0x330] sm:$0xff] %v2671
  %2832 = vst [vmem:[%s4 + $0x338] sm:$0xff] %v2672
  %2833 = vst [vmem:[%s4 + $0x340] sm:$0xff] %v2673
  %2834 = vst [vmem:[%s4 + $0x348] sm:$0xff] %v2674
  %2835 = vst [vmem:[%s4 + $0x350] sm:$0xff] %v2675
  %2836 = vst [vmem:[%s4 + $0x358] sm:$0xff] %v2676
  %2837 = vst [vmem:[%s4 + $0x360] sm:$0xff] %v2677
  %2838 = vst [vmem:[%s4 + $0x368] sm:$0xff] %v2678
  %2839 = vst [vmem:[%s4 + $0x370] sm:$0xff] %v2679
  %2840 = vst [vmem:[%s4 + $0x378] sm:$0xff] %v2680
  %2841 = vst [vmem:[%s4 + $0x380] sm:$0xff] %v2681
  %2842 = vst [vmem:[%s4 + $0x388] sm:$0xff] %v2682
  %2843 = vst [vmem:[%s4 + $0x390] sm:$0xff] %v2683
  %2844 = vst [vmem:[%s4 + $0x398] sm:$0xff] %v2684
  %2845 = vst [vmem:[%s4 + $0x3a0] sm:$0xff] %v2685
  %2846 = vst [vmem:[%s4 + $0x3a8] sm:$0xff] %v2686
  %2847 = vst [vmem:[%s4 + $0x3b0] sm:$0xff] %v2687
  %2848 = vst [vmem:[%s4 + $0x3b8] sm:$0xff] %v2688
  %2849 = vst [vmem:[%s4 + $0x3c0] sm:$0xff] %v2689
  %2850 = vst [vmem:[%s4 + $0x3c8] sm:$0xff] %v2690
  %2851 = vst [vmem:[%s4 + $0x3d0] sm:$0xff] %v2691
  %2852 = vst [vmem:[%s4 + $0x3d8] sm:$0xff] %v2692
  %2853 = vst [vmem:[%s4 + $0x3e0] sm:$0xff] %v2693
  %2854 = vst [vmem:[%s4 + $0x3e8] sm:$0xff] %v2694
  %2855 = vst [vmem:[%s4 + $0x3f0] sm:$0xff] %v2695
  %2856 = vst [vmem:[%s4 + $0x3f8] sm:$0xff] %v2696
  %2857 = vst [vmem:[%s4 + $0x400] sm:$0xff] %v2697
  %2858 = vst [vmem:[%s4 + $0x408] sm:$0xff] %v2698
  %2859 = vst [vmem:[%s4 + $0x410] sm:$0xff] %v2699
  %2860 = vst [vmem:[%s4 + $0x418] sm:$0xff] %v2700
  %2861 = vst [vmem:[%s4 + $0x420] sm:$0xff] %v2701
  %2862 = vst [vmem:[%s4 + $0x428] sm:$0xff] %v2702
  %2863 = vst [vmem:[%s4 + $0x430] sm:$0xff] %v2703
  %2864 = vst [vmem:[%s4 + $0x438] sm:$0xff] %v2704
  %2865 = vst [vmem:[%s4 + $0x440] sm:$0xff] %v2705
  %2866 = vst [vmem:[%s4 + $0x448] sm:$0xff] %v2706
  %2867 = vst [vmem:[%s4 + $0x450] sm:$0xff] %v2707
  %2868 = vst [vmem:[%s4 + $0x458] sm:$0xff] %v2708
  %2869 = vst [vmem:[%s4 + $0x460] sm:$0xff] %v2709
  %2870 = vst [vmem:[%s4 + $0x468] sm:$0xff] %v2710
  %2871 = vst [vmem:[%s4 + $0x470] sm:$0xff] %v2711
  %2872 = vst [vmem:[%s4 + $0x478] sm:$0xff] %v2712
  %2873 = vst [vmem:[%s4 + $0x480] sm:$0xff] %v2713
  %2874 = vst [vmem:[%s4 + $0x488] sm:$0xff] %v2714
  %2875 = vst [vmem:[%s4 + $0x490] sm:$0xff] %v2715
  %2876 = vst [vmem:[%s4 + $0x498] sm:$0xff] %v2716
  %2877 = vst [vmem:[%s4 + $0x4a0] sm:$0xff] %v2717
  %2878 = vst [vmem:[%s4 + $0x4a8] sm:$0xff] %v2718
  %2879 = vst [vmem:[%s4 + $0x4b0] sm:$0xff] %v2719
  %2880 = vst [vmem:[%s4 + $0x4b8] sm:$0xff] %v2720
  %2881 = vst [vmem:[%s4 + $0x4c0] sm:$0xff] %v2721
  %2882 = vst [vmem:[%s4 + $0x4c8] sm:$0xff] %v2722
  %2883 = vst [vmem:[%s4 + $0x4d0] sm:$0xff] %v2723
  %2884 = vst [vmem:[%s4 + $0x4d8] sm:$0xff] %v2724
  %2885 = vst [vmem:[%s4 + $0x4e0] sm:$0xff] %v2725
  %2886 = vst [vmem:[%s4 + $0x4e8] sm:$0xff] %v2726
  %2887 = vst [vmem:[%s4 + $0x4f0] sm:$0xff] %v2727
  %2888 = vst [vmem:[%s4 + $0x4f8] sm:$0xff] %v2728
  // Predicated region
  $region18: #{multichev_forward.1} parent=0 // pred_check
    _
  $region19: #{multichev_forward.1} parent=0 // pred_check_branch
    %2890 = sbr.rel (0) target = $region21
  $region20: #{multichev_forward.1} parent=0 // pred_region
    _
  $region21: #{multichev_forward.1} parent=0 // pred_fallthru
    _
  // Predicated region
  $region22: #{multichev_forward.1} parent=0 // pred_check
    _
  $region23: #{multichev_forward.1} parent=0 // pred_check_branch
    %2892 = sbr.rel (0) target = $region25
  $region24: #{multichev_forward.1} parent=0 // pred_region
    _
  $region25: #{multichev_forward.1} parent=0 // pred_fallthru
    _

</llo_original>
